<compile_context>
chip_gen: v6e
topology: v6e:2x2x1
jax: 0.10.0
libtpu: 0.0.40
codegen_flags: <defaults>
</compile_context>

<pallas_src>
import functools

import jax
import jax.numpy as jnp
from jax import lax
from jax.experimental import pallas as pl
from jax.experimental.pallas import tpu as pltpu


def _round_up(x: int, m: int) -> int:
    return ((x + m - 1) // m) * m


def _pad_gate_blocks(w, h: int, hp: int):
    """(4H, K) -> (4Hp, K): zero-pad each of the 4 LSTM gate blocks to Hp rows."""
    k = w.shape[-1]
    w4 = w.reshape(4, h, k)
    return jnp.zeros((4, hp, k), w.dtype).at[:, :h, :].set(w4).reshape(4 * hp, k)


def _lstm_last_kernel(nvt_ref, len_ref, x_ref, wih_ref, whh_ref, b_ref,
                      out_ref, h_scr, c_scr, *, hidden_p: int, t_tile: int):
    """One (batch-tile, time-tile) grid step of the masked LSTM recurrence.

    nvt_ref : (1,)          i32 SMEM  number of valid time tiles (scalar prefetch)
    len_ref : (Bt, 1)       i32 VMEM  per-sequence lengths
    x_ref   : (Bt, Tt, D)   bf16 VMEM streamed input tile
    wih_ref : (D, 4Hp)      bf16 VMEM W_ih^T (gate blocks zero-padded to Hp)
    whh_ref : (Hp, 4Hp)     bf16 VMEM W_hh^T (padded)
    b_ref   : (1, 4Hp)      f32  VMEM b_ih + b_hh (padded)
    out_ref : (Bt, Hp)      f32  VMEM pooled ('last') output, written once
    h_scr, c_scr : (Bt, Hp) f32  VMEM state carried across time tiles
    """
    Hp = hidden_p
    bt, _, d = x_ref.shape
    t_idx = pl.program_id(1)

    @pl.when(t_idx == 0)
    def _init():
        h_scr[...] = jnp.zeros_like(h_scr)
        c_scr[...] = jnp.zeros_like(c_scr)

    # Skip whole time tiles past max(lengths): no compute, and the clamped
    # x index_map also avoids fetching new data for them.
    @pl.when(t_idx < nvt_ref[0])
    def _compute():
        # --- phase 1 (parallel): input projection for the whole tile -------
        # One (Bt*Tt, D) x (D, 4Hp) bf16 MXU matmul instead of Tt tiny ones
        # on the serial path; bias folded in here too.  The collapse of the
        # leading dims is done in f32 so it stays sublane-tile aligned.
        x2 = x_ref[...].astype(jnp.float32).reshape(bt * t_tile, d)
        gx = jnp.dot(x2.astype(jnp.bfloat16), wih_ref[...],
                     preferred_element_type=jnp.float32) + b_ref[...]
        gx = gx.reshape(bt, t_tile, 4 * Hp)

        whh = whh_ref[...]              # hoisted: loaded once per tile
        lens = len_ref[...]             # (Bt, 1) i32
        t0 = t_idx * t_tile

        # --- phase 2 (serial): fully unrolled recurrence, state in vregs ---
        h = h_scr[...]
        c = c_scr[...]
        for tl in range(t_tile):
            gates = gx[:, tl, :] + jnp.dot(h.astype(jnp.bfloat16), whh,
                                           preferred_element_type=jnp.float32)
            i_g = jax.nn.sigmoid(gates[:, 0 * Hp:1 * Hp])
            f_g = jax.nn.sigmoid(gates[:, 1 * Hp:2 * Hp])
            g_g = jnp.tanh(gates[:, 2 * Hp:3 * Hp])
            o_g = jax.nn.sigmoid(gates[:, 3 * Hp:4 * Hp])
            c_new = f_g * c + i_g * g_g
            h_new = o_g * jnp.tanh(c_new)
            # PackedSequence semantics: freeze state past each length.
            valid = (t0 + tl) < lens                      # (Bt, 1) bool
            c = jnp.where(valid, c_new, c)
            h = jnp.where(valid, h_new, h)
        h_scr[...] = h
        c_scr[...] = c

    # pooling == 'last': hidden state at the final valid timestep.
    @pl.when(t_idx == pl.num_programs(1) - 1)
    def _emit():
        out_ref[...] = h_scr[...]


def pooled_rnn_encoder(data, mask, w_ih, w_hh, b_ih, b_hh, *,
                       t_tile=8, b_tile=None):
    """data: (B, T, D) f32; mask: (B, T) prefix mask (or None). Returns (B, H) f32."""
    B, T, D = data.shape
    H = w_hh.shape[1]
    assert w_ih.shape == (4 * H, D) and w_hh.shape == (4 * H, H)

    Hp = _round_up(H, 128)                  # lane-aligned gate blocks & output
    t_tile = max(8, _round_up(t_tile, 8))   # keep (8, 128) block rule happy
    Tp = _round_up(T, t_tile)
    if b_tile is None:
        # For large B set b_tile to a multiple of 8 (< B) so the 'parallel'
        # batch axis lets v7x's two TensorCores split the work.
        b_tile = B
    assert B % b_tile == 0
    nb, nt = B // b_tile, Tp // t_tile

    # ---- lengths / valid-tile count (replaces the dense mask stream) ----
    if mask is None:
        lengths = jnp.full((B,), T, dtype=jnp.int32)
    else:
        lengths = jnp.sum(mask.astype(jnp.int32), axis=1)
    max_len = jnp.max(lengths)
    nvt = jnp.maximum((max_len + t_tile - 1) // t_tile, 1)
    nvt = nvt.astype(jnp.int32).reshape(1)
    lengths_2d = lengths.reshape(B, 1).astype(jnp.int32)

    # ---- operands: bf16 matmul inputs, f32 bias, zero-padded gate blocks ----
    x = data
    if Tp != T:
        x = jnp.pad(x, ((0, 0), (0, Tp - T), (0, 0)))
    x = x.astype(jnp.bfloat16)                                        # (B, Tp, D)
    wih_p = _pad_gate_blocks(w_ih, H, Hp).T.astype(jnp.bfloat16)      # (D, 4Hp)
    whh_p = jnp.pad(_pad_gate_blocks(w_hh, H, Hp),
                    ((0, 0), (0, Hp - H))).T.astype(jnp.bfloat16)     # (Hp, 4Hp)
    bias_p = _pad_gate_blocks(
        (b_ih + b_hh).astype(jnp.float32).reshape(4 * H, 1), H, Hp
    ).reshape(1, 4 * Hp)                                              # (1, 4Hp)

    kernel = functools.partial(_lstm_last_kernel, hidden_p=Hp, t_tile=t_tile)

    grid_spec = pltpu.PrefetchScalarGridSpec(
        num_scalar_prefetch=1,
        grid=(nb, nt),
        in_specs=[
            pl.BlockSpec((b_tile, 1), lambda b, t, n: (b, 0)),            # lengths
            pl.BlockSpec((b_tile, t_tile, D),                             # x tile
                         lambda b, t, n: (b, jnp.minimum(t, n[0] - 1), 0)),
            pl.BlockSpec((D, 4 * Hp), lambda b, t, n: (0, 0)),            # W_ih^T
            pl.BlockSpec((Hp, 4 * Hp), lambda b, t, n: (0, 0)),           # W_hh^T
            pl.BlockSpec((1, 4 * Hp), lambda b, t, n: (0, 0)),            # bias
        ],
        out_specs=pl.BlockSpec((b_tile, Hp), lambda b, t, n: (b, 0)),
        scratch_shapes=[
            pltpu.VMEM((b_tile, Hp), jnp.float32),   # h
            pltpu.VMEM((b_tile, Hp), jnp.float32),   # c
        ],
    )

    cost = pl.CostEstimate(
        flops=2 * B * Tp * (D + Hp) * 4 * Hp,
        transcendentals=5 * B * Tp * Hp,
        bytes_accessed=(B * Tp * D * 2 + D * 4 * Hp * 2 + Hp * 4 * Hp * 2
                        + 4 * Hp * 4 + B * 4 + B * Hp * 4),
    )

    out = pl.pallas_call(
        kernel,
        out_shape=jax.ShapeDtypeStruct((B, Hp), jnp.float32),
        grid_spec=grid_spec,
        compiler_params=pltpu.CompilerParams(
            dimension_semantics=("parallel", "arbitrary"),
            # Tiles are tiny here; 32 MiB is safely under every generation's
            # VMEM (v5e/v6e: 128 MiB physical, v7x: 64 MiB).
            vmem_limit_bytes=32 * 1024 * 1024,
        ),
        cost_estimate=cost,
    )(nvt, lengths_2d, x, wih_p, whh_p, bias_p)

    return out[:, :H]


def _reference(data, mask, w_ih, w_hh, b_ih, b_hh):
    """Pure-JAX reference with the same numerics recipe (bf16 matmul inputs,
    f32 accumulation and f32 element-wise state math)."""
    B, T, D = data.shape
    H = w_hh.shape[1]
    bias = (b_ih + b_hh).astype(jnp.float32)
    wih_t = w_ih.T.astype(jnp.bfloat16)
    whh_t = w_hh.T.astype(jnp.bfloat16)
    lengths = jnp.sum(mask.astype(jnp.int32), axis=1)

    def step(carry, inp):
        h, c = carry
        x_t, t = inp
        gates = (jnp.dot(x_t.astype(jnp.bfloat16), wih_t,
                         preferred_element_type=jnp.float32)
                 + jnp.dot(h.astype(jnp.bfloat16), whh_t,
                           preferred_element_type=jnp.float32)
                 + bias)
        i = jax.nn.sigmoid(gates[:, 0 * H:1 * H])
        f = jax.nn.sigmoid(gates[:, 1 * H:2 * H])
        g = jnp.tanh(gates[:, 2 * H:3 * H])
        o = jax.nn.sigmoid(gates[:, 3 * H:4 * H])
        c_new = f * c + i * g
        h_new = o * jnp.tanh(c_new)
        valid = (t < lengths)[:, None]
        return (jnp.where(valid, h_new, h), jnp.where(valid, c_new, c)), None

    h0 = jnp.zeros((B, H), jnp.float32)
    c0 = jnp.zeros((B, H), jnp.float32)
    (h, _), _ = lax.scan(step, (h0, c0),
                         (jnp.transpose(data, (1, 0, 2)), jnp.arange(T)))
    return h


if __name__ == "__main__":
    B, T, D, H = 2, 8, 16, 32   # batch, seq, input_size, hidden_size

    key = jax.random.PRNGKey(0)
    k_x, k_wih, k_whh, k_bih, k_bhh = jax.random.split(key, 5)

    data = jax.random.normal(k_x, (B, T, D), dtype=jnp.float32)

    # Prefix padding mask: example 0 has length T, example 1 has length T-3.
    lengths = jnp.array([T, T - 3], dtype=jnp.int32)
    mask = (jnp.arange(T)[None, :] < lengths[:, None]).astype(jnp.float32)

    # LSTM parameters with nn.LSTM shapes, PyTorch gate order [i, f, g, o].
    scale = 1.0 / jnp.sqrt(jnp.float32(H))
    w_ih = jax.random.uniform(k_wih, (4 * H, D), jnp.float32, -scale, scale)
    w_hh = jax.random.uniform(k_whh, (4 * H, H), jnp.float32, -scale, scale)
    b_ih = jax.random.uniform(k_bih, (4 * H,), jnp.float32, -scale, scale)
    b_hh = jax.random.uniform(k_bhh, (4 * H,), jnp.float32, -scale, scale)

    out = pooled_rnn_encoder(data, mask, w_ih, w_hh, b_ih, b_hh)
    out = jax.block_until_ready(out)
    assert out.shape == (B, H)

    ref = _reference(data, mask, w_ih, w_hh, b_ih, b_hh)
    assert jnp.allclose(out, ref, atol=1e-3, rtol=1e-3), (
        f"mismatch vs reference: max abs err = {jnp.max(jnp.abs(out - ref))}")

    print("KERNEL_OK")
</pallas_src>

<mosaic_0001>
module attributes {stable_mosaic.version = 11 : i64} {
  func.func @_lstm_last_kernel(%arg0: i32, %arg1: i32, %arg2: memref<1xi32, #tpu.memory_space<smem>>, %arg3: memref<2x1xi32, #tpu.memory_space<vmem>>, %arg4: memref<2x8x16xbf16, #tpu.memory_space<vmem>>, %arg5: memref<16x512xbf16, #tpu.memory_space<vmem>>, %arg6: memref<128x512xbf16, #tpu.memory_space<vmem>>, %arg7: memref<1x512xf32, #tpu.memory_space<vmem>>, %arg8: memref<2x128xf32, #tpu.memory_space<vmem>>, %arg9: memref<2x128xf32, #tpu.memory_space<vmem>>, %arg10: memref<2x128xf32, #tpu.memory_space<vmem>>) attributes {dimension_semantics = [#tpu.dimension_semantics<parallel>, #tpu.dimension_semantics<arbitrary>], iteration_bounds = array<i64: 1, 1>, scalar_prefetch = 1 : i64, scratch_operands = 2 : i64, tpu.core_type = #tpu.core_type<tc>, window_params = [{transform_indices = @transform_0, window_bounds = array<i64: 2, 1>}, {transform_indices = @transform_1, window_bounds = array<i64: 2, 8, 16>}, {pipeline_mode = #tpu.pipeline_mode<synchronous>, transform_indices = @transform_2, window_bounds = array<i64: 16, 512>}, {pipeline_mode = #tpu.pipeline_mode<synchronous>, transform_indices = @transform_3, window_bounds = array<i64: 128, 512>}, {pipeline_mode = #tpu.pipeline_mode<synchronous>, transform_indices = @transform_4, window_bounds = array<i64: 1, 512>}, {transform_indices = @transform_5, window_bounds = array<i64: 2, 128>}]} {
    %c0_i32 = arith.constant 0 : i32
    %0 = arith.cmpi eq, %arg1, %c0_i32 : i32
    %1 = arith.extui %0 : i1 to i32
    %c0_i32_0 = arith.constant 0 : i32
    %2 = arith.cmpi ne, %1, %c0_i32_0 : i32
    scf.if %2 {
      %cst = arith.constant 0.000000e+00 : f32
      %10 = vector.broadcast %cst : f32 to vector<2x128xf32>
      %c0_4 = arith.constant 0 : index
      %c0_5 = arith.constant 0 : index
      %11 = vector.load %arg9[%c0_4, %c0_5] : memref<2x128xf32, #tpu.memory_space<vmem>>, vector<2x128xf32>
      tpu.vector_store %arg9[%c0_4, %c0_5], %10 {strides = array<i32>} : memref<2x128xf32, #tpu.memory_space<vmem>>, vector<2x128xf32>,
      %cst_6 = arith.constant 0.000000e+00 : f32
      %12 = vector.broadcast %cst_6 : f32 to vector<2x128xf32>
      %c0_7 = arith.constant 0 : index
      %c0_8 = arith.constant 0 : index
      %13 = vector.load %arg10[%c0_7, %c0_8] : memref<2x128xf32, #tpu.memory_space<vmem>>, vector<2x128xf32>
      tpu.vector_store %arg10[%c0_7, %c0_8], %12 {strides = array<i32>} : memref<2x128xf32, #tpu.memory_space<vmem>>, vector<2x128xf32>,
    } else {
    }
    %c0 = arith.constant 0 : index
    %3 = memref.load %arg2[%c0] : memref<1xi32, #tpu.memory_space<smem>>
    %4 = arith.cmpi slt, %arg1, %3 : i32
    %5 = arith.extui %4 : i1 to i32
    %c0_i32_1 = arith.constant 0 : i32
    %6 = arith.cmpi ne, %5, %c0_i32_1 : i32
    scf.if %6 {
      %c0_4 = arith.constant 0 : index
      %c0_5 = arith.constant 0 : index
      %c0_6 = arith.constant 0 : index
      %10 = vector.load %arg4[%c0_4, %c0_5, %c0_6] : memref<2x8x16xbf16, #tpu.memory_space<vmem>>, vector<2x8x16xbf16>
      %11 = arith.extf %10 : vector<2x8x16xbf16> to vector<2x8x16xf32>
      %12 = vector.shape_cast %11 : vector<2x8x16xf32> to vector<16x16xf32>
      %13 = arith.truncf %12 : vector<16x16xf32> to vector<16x16xbf16>
      %c0_7 = arith.constant 0 : index
      %c0_8 = arith.constant 0 : index
      %14 = vector.load %arg5[%c0_7, %c0_8] : memref<16x512xbf16, #tpu.memory_space<vmem>>, vector<16x512xbf16>
      %cst = arith.constant dense<0.000000e+00> : vector<16x512xf32>
      %15 = tpu.matmul %13, %14, %cst {dimension_numbers = #tpu.dot_dimension_numbers<[1], [0], [0], [1], [0, 0, 1, 1], [], []>} : vector<16x16xbf16>, vector<16x512xbf16>, vector<16x512xf32> -> vector<16x512xf32>
      %c0_9 = arith.constant 0 : index
      %c0_10 = arith.constant 0 : index
      %16 = vector.load %arg7[%c0_9, %c0_10] : memref<1x512xf32, #tpu.memory_space<vmem>>, vector<1x512xf32>
      %17 = vector.broadcast %16 : vector<1x512xf32> to vector<16x512xf32>
      %18 = arith.addf %15, %17 : vector<16x512xf32>
      %19 = vector.shape_cast %18 : vector<16x512xf32> to vector<2x8x512xf32>
      %c0_11 = arith.constant 0 : index
      %c0_12 = arith.constant 0 : index
      %20 = vector.load %arg6[%c0_11, %c0_12] : memref<128x512xbf16, #tpu.memory_space<vmem>>, vector<128x512xbf16>
      %c0_13 = arith.constant 0 : index
      %c0_14 = arith.constant 0 : index
      %21 = vector.load %arg3[%c0_13, %c0_14] : memref<2x1xi32, #tpu.memory_space<vmem>>, vector<2x1xi32>
      %c8_i32 = arith.constant 8 : i32
      %22 = arith.muli %arg1, %c8_i32 : i32
      %c0_15 = arith.constant 0 : index
      %c0_16 = arith.constant 0 : index
      %23 = vector.load %arg9[%c0_15, %c0_16] : memref<2x128xf32, #tpu.memory_space<vmem>>, vector<2x128xf32>
      %c0_17 = arith.constant 0 : index
      %c0_18 = arith.constant 0 : index
      %24 = vector.load %arg10[%c0_17, %c0_18] : memref<2x128xf32, #tpu.memory_space<vmem>>, vector<2x128xf32>
      %25 = vector.extract_strided_slice %19 {offsets = [0, 0, 0], sizes = [2, 1, 512], strides = [1, 1, 1]} : vector<2x8x512xf32> to vector<2x1x512xf32>
      %26 = vector.shape_cast %25 : vector<2x1x512xf32> to vector<2x512xf32>
      %27 = arith.truncf %23 : vector<2x128xf32> to vector<2x128xbf16>
      %cst_19 = arith.constant dense<0.000000e+00> : vector<2x512xf32>
      %28 = tpu.matmul %27, %20, %cst_19 {dimension_numbers = #tpu.dot_dimension_numbers<[1], [0], [0], [1], [0, 0, 1, 1], [], []>} : vector<2x128xbf16>, vector<128x512xbf16>, vector<2x512xf32> -> vector<2x512xf32>
      %29 = arith.addf %26, %28 : vector<2x512xf32>
      %30 = vector.extract_strided_slice %29 {offsets = [0, 0], sizes = [2, 128], strides = [1, 1]} : vector<2x512xf32> to vector<2x128xf32>
      %31 = arith.negf %30 : vector<2x128xf32>
      %32 = math.exp %31 : vector<2x128xf32>
      %cst_20 = arith.constant 1.000000e+00 : f32
      %33 = vector.broadcast %cst_20 : f32 to vector<2x128xf32>
      %34 = arith.addf %33, %32 : vector<2x128xf32>
      %35 = arith.divf %33, %34 : vector<2x128xf32>
      %36 = vector.extract_strided_slice %29 {offsets = [0, 128], sizes = [2, 128], strides = [1, 1]} : vector<2x512xf32> to vector<2x128xf32>
      %37 = arith.negf %36 : vector<2x128xf32>
      %38 = math.exp %37 : vector<2x128xf32>
      %cst_21 = arith.constant 1.000000e+00 : f32
      %39 = vector.broadcast %cst_21 : f32 to vector<2x128xf32>
      %40 = arith.addf %39, %38 : vector<2x128xf32>
      %41 = arith.divf %39, %40 : vector<2x128xf32>
      %42 = vector.extract_strided_slice %29 {offsets = [0, 256], sizes = [2, 128], strides = [1, 1]} : vector<2x512xf32> to vector<2x128xf32>
      %43 = math.tanh %42 : vector<2x128xf32>
      %44 = vector.extract_strided_slice %29 {offsets = [0, 384], sizes = [2, 128], strides = [1, 1]} : vector<2x512xf32> to vector<2x128xf32>
      %45 = arith.negf %44 : vector<2x128xf32>
      %46 = math.exp %45 : vector<2x128xf32>
      %cst_22 = arith.constant 1.000000e+00 : f32
      %47 = vector.broadcast %cst_22 : f32 to vector<2x128xf32>
      %48 = arith.addf %47, %46 : vector<2x128xf32>
      %49 = arith.divf %47, %48 : vector<2x128xf32>
      %50 = arith.mulf %41, %24 : vector<2x128xf32>
      %51 = arith.mulf %35, %43 : vector<2x128xf32>
      %52 = arith.addf %50, %51 : vector<2x128xf32>
      %53 = math.tanh %52 : vector<2x128xf32>
      %54 = arith.mulf %49, %53 : vector<2x128xf32>
      %c0_i32_23 = arith.constant 0 : i32
      %55 = arith.addi %22, %c0_i32_23 : i32
      %56 = vector.broadcast %55 : i32 to vector<2x1xi32>
      %57 = arith.cmpi slt, %56, %21 : vector<2x1xi32>
      %58 = vector.shape_cast %57 : vector<2x1xi1> to vector<2x1xi1>
      %59 = vector.broadcast %58 : vector<2x1xi1> to vector<2x128xi1>
      %60 = arith.select %59, %52, %24 : vector<2x128xi1>, vector<2x128xf32>
      %61 = vector.shape_cast %57 : vector<2x1xi1> to vector<2x1xi1>
      %62 = vector.broadcast %61 : vector<2x1xi1> to vector<2x128xi1>
      %63 = arith.select %62, %54, %23 : vector<2x128xi1>, vector<2x128xf32>
      %64 = vector.extract_strided_slice %19 {offsets = [0, 1, 0], sizes = [2, 1, 512], strides = [1, 1, 1]} : vector<2x8x512xf32> to vector<2x1x512xf32>
      %65 = vector.shape_cast %64 : vector<2x1x512xf32> to vector<2x512xf32>
      %66 = arith.truncf %63 : vector<2x128xf32> to vector<2x128xbf16>
      %cst_24 = arith.constant dense<0.000000e+00> : vector<2x512xf32>
      %67 = tpu.matmul %66, %20, %cst_24 {dimension_numbers = #tpu.dot_dimension_numbers<[1], [0], [0], [1], [0, 0, 1, 1], [], []>} : vector<2x128xbf16>, vector<128x512xbf16>, vector<2x512xf32> -> vector<2x512xf32>
      %68 = arith.addf %65, %67 : vector<2x512xf32>
      %69 = vector.extract_strided_slice %68 {offsets = [0, 0], sizes = [2, 128], strides = [1, 1]} : vector<2x512xf32> to vector<2x128xf32>
      %70 = arith.negf %69 : vector<2x128xf32>
      %71 = math.exp %70 : vector<2x128xf32>
      %cst_25 = arith.constant 1.000000e+00 : f32
      %72 = vector.broadcast %cst_25 : f32 to vector<2x128xf32>
      %73 = arith.addf %72, %71 : vector<2x128xf32>
      %74 = arith.divf %72, %73 : vector<2x128xf32>
      %75 = vector.extract_strided_slice %68 {offsets = [0, 128], sizes = [2, 128], strides = [1, 1]} : vector<2x512xf32> to vector<2x128xf32>
      %76 = arith.negf %75 : vector<2x128xf32>
      %77 = math.exp %76 : vector<2x128xf32>
      %cst_26 = arith.constant 1.000000e+00 : f32
      %78 = vector.broadcast %cst_26 : f32 to vector<2x128xf32>
      %79 = arith.addf %78, %77 : vector<2x128xf32>
      %80 = arith.divf %78, %79 : vector<2x128xf32>
      %81 = vector.extract_strided_slice %68 {offsets = [0, 256], sizes = [2, 128], strides = [1, 1]} : vector<2x512xf32> to vector<2x128xf32>
      %82 = math.tanh %81 : vector<2x128xf32>
      %83 = vector.extract_strided_slice %68 {offsets = [0, 384], sizes = [2, 128], strides = [1, 1]} : vector<2x512xf32> to vector<2x128xf32>
      %84 = arith.negf %83 : vector<2x128xf32>
      %85 = math.exp %84 : vector<2x128xf32>
      %cst_27 = arith.constant 1.000000e+00 : f32
      %86 = vector.broadcast %cst_27 : f32 to vector<2x128xf32>
      %87 = arith.addf %86, %85 : vector<2x128xf32>
      %88 = arith.divf %86, %87 : vector<2x128xf32>
      %89 = arith.mulf %80, %60 : vector<2x128xf32>
      %90 = arith.mulf %74, %82 : vector<2x128xf32>
      %91 = arith.addf %89, %90 : vector<2x128xf32>
      %92 = math.tanh %91 : vector<2x128xf32>
      %93 = arith.mulf %88, %92 : vector<2x128xf32>
      %c1_i32 = arith.constant 1 : i32
      %94 = arith.addi %22, %c1_i32 : i32
      %95 = vector.broadcast %94 : i32 to vector<2x1xi32>
      %96 = arith.cmpi slt, %95, %21 : vector<2x1xi32>
      %97 = vector.shape_cast %96 : vector<2x1xi1> to vector<2x1xi1>
      %98 = vector.broadcast %97 : vector<2x1xi1> to vector<2x128xi1>
      %99 = arith.select %98, %91, %60 : vector<2x128xi1>, vector<2x128xf32>
      %100 = vector.shape_cast %96 : vector<2x1xi1> to vector<2x1xi1>
      %101 = vector.broadcast %100 : vector<2x1xi1> to vector<2x128xi1>
      %102 = arith.select %101, %93, %63 : vector<2x128xi1>, vector<2x128xf32>
      %103 = vector.extract_strided_slice %19 {offsets = [0, 2, 0], sizes = [2, 1, 512], strides = [1, 1, 1]} : vector<2x8x512xf32> to vector<2x1x512xf32>
      %104 = vector.shape_cast %103 : vector<2x1x512xf32> to vector<2x512xf32>
      %105 = arith.truncf %102 : vector<2x128xf32> to vector<2x128xbf16>
      %cst_28 = arith.constant dense<0.000000e+00> : vector<2x512xf32>
      %106 = tpu.matmul %105, %20, %cst_28 {dimension_numbers = #tpu.dot_dimension_numbers<[1], [0], [0], [1], [0, 0, 1, 1], [], []>} : vector<2x128xbf16>, vector<128x512xbf16>, vector<2x512xf32> -> vector<2x512xf32>
      %107 = arith.addf %104, %106 : vector<2x512xf32>
      %108 = vector.extract_strided_slice %107 {offsets = [0, 0], sizes = [2, 128], strides = [1, 1]} : vector<2x512xf32> to vector<2x128xf32>
      %109 = arith.negf %108 : vector<2x128xf32>
      %110 = math.exp %109 : vector<2x128xf32>
      %cst_29 = arith.constant 1.000000e+00 : f32
      %111 = vector.broadcast %cst_29 : f32 to vector<2x128xf32>
      %112 = arith.addf %111, %110 : vector<2x128xf32>
      %113 = arith.divf %111, %112 : vector<2x128xf32>
      %114 = vector.extract_strided_slice %107 {offsets = [0, 128], sizes = [2, 128], strides = [1, 1]} : vector<2x512xf32> to vector<2x128xf32>
      %115 = arith.negf %114 : vector<2x128xf32>
      %116 = math.exp %115 : vector<2x128xf32>
      %cst_30 = arith.constant 1.000000e+00 : f32
      %117 = vector.broadcast %cst_30 : f32 to vector<2x128xf32>
      %118 = arith.addf %117, %116 : vector<2x128xf32>
      %119 = arith.divf %117, %118 : vector<2x128xf32>
      %120 = vector.extract_strided_slice %107 {offsets = [0, 256], sizes = [2, 128], strides = [1, 1]} : vector<2x512xf32> to vector<2x128xf32>
      %121 = math.tanh %120 : vector<2x128xf32>
      %122 = vector.extract_strided_slice %107 {offsets = [0, 384], sizes = [2, 128], strides = [1, 1]} : vector<2x512xf32> to vector<2x128xf32>
      %123 = arith.negf %122 : vector<2x128xf32>
      %124 = math.exp %123 : vector<2x128xf32>
      %cst_31 = arith.constant 1.000000e+00 : f32
      %125 = vector.broadcast %cst_31 : f32 to vector<2x128xf32>
      %126 = arith.addf %125, %124 : vector<2x128xf32>
      %127 = arith.divf %125, %126 : vector<2x128xf32>
      %128 = arith.mulf %119, %99 : vector<2x128xf32>
      %129 = arith.mulf %113, %121 : vector<2x128xf32>
      %130 = arith.addf %128, %129 : vector<2x128xf32>
      %131 = math.tanh %130 : vector<2x128xf32>
      %132 = arith.mulf %127, %131 : vector<2x128xf32>
      %c2_i32 = arith.constant 2 : i32
      %133 = arith.addi %22, %c2_i32 : i32
      %134 = vector.broadcast %133 : i32 to vector<2x1xi32>
      %135 = arith.cmpi slt, %134, %21 : vector<2x1xi32>
      %136 = vector.shape_cast %135 : vector<2x1xi1> to vector<2x1xi1>
      %137 = vector.broadcast %136 : vector<2x1xi1> to vector<2x128xi1>
      %138 = arith.select %137, %130, %99 : vector<2x128xi1>, vector<2x128xf32>
      %139 = vector.shape_cast %135 : vector<2x1xi1> to vector<2x1xi1>
      %140 = vector.broadcast %139 : vector<2x1xi1> to vector<2x128xi1>
      %141 = arith.select %140, %132, %102 : vector<2x128xi1>, vector<2x128xf32>
      %142 = vector.extract_strided_slice %19 {offsets = [0, 3, 0], sizes = [2, 1, 512], strides = [1, 1, 1]} : vector<2x8x512xf32> to vector<2x1x512xf32>
      %143 = vector.shape_cast %142 : vector<2x1x512xf32> to vector<2x512xf32>
      %144 = arith.truncf %141 : vector<2x128xf32> to vector<2x128xbf16>
      %cst_32 = arith.constant dense<0.000000e+00> : vector<2x512xf32>
      %145 = tpu.matmul %144, %20, %cst_32 {dimension_numbers = #tpu.dot_dimension_numbers<[1], [0], [0], [1], [0, 0, 1, 1], [], []>} : vector<2x128xbf16>, vector<128x512xbf16>, vector<2x512xf32> -> vector<2x512xf32>
      %146 = arith.addf %143, %145 : vector<2x512xf32>
      %147 = vector.extract_strided_slice %146 {offsets = [0, 0], sizes = [2, 128], strides = [1, 1]} : vector<2x512xf32> to vector<2x128xf32>
      %148 = arith.negf %147 : vector<2x128xf32>
      %149 = math.exp %148 : vector<2x128xf32>
      %cst_33 = arith.constant 1.000000e+00 : f32
      %150 = vector.broadcast %cst_33 : f32 to vector<2x128xf32>
      %151 = arith.addf %150, %149 : vector<2x128xf32>
      %152 = arith.divf %150, %151 : vector<2x128xf32>
      %153 = vector.extract_strided_slice %146 {offsets = [0, 128], sizes = [2, 128], strides = [1, 1]} : vector<2x512xf32> to vector<2x128xf32>
      %154 = arith.negf %153 : vector<2x128xf32>
      %155 = math.exp %154 : vector<2x128xf32>
      %cst_34 = arith.constant 1.000000e+00 : f32
      %156 = vector.broadcast %cst_34 : f32 to vector<2x128xf32>
      %157 = arith.addf %156, %155 : vector<2x128xf32>
      %158 = arith.divf %156, %157 : vector<2x128xf32>
      %159 = vector.extract_strided_slice %146 {offsets = [0, 256], sizes = [2, 128], strides = [1, 1]} : vector<2x512xf32> to vector<2x128xf32>
      %160 = math.tanh %159 : vector<2x128xf32>
      %161 = vector.extract_strided_slice %146 {offsets = [0, 384], sizes = [2, 128], strides = [1, 1]} : vector<2x512xf32> to vector<2x128xf32>
      %162 = arith.negf %161 : vector<2x128xf32>
      %163 = math.exp %162 : vector<2x128xf32>
      %cst_35 = arith.constant 1.000000e+00 : f32
      %164 = vector.broadcast %cst_35 : f32 to vector<2x128xf32>
      %165 = arith.addf %164, %163 : vector<2x128xf32>
      %166 = arith.divf %164, %165 : vector<2x128xf32>
      %167 = arith.mulf %158, %138 : vector<2x128xf32>
      %168 = arith.mulf %152, %160 : vector<2x128xf32>
      %169 = arith.addf %167, %168 : vector<2x128xf32>
      %170 = math.tanh %169 : vector<2x128xf32>
      %171 = arith.mulf %166, %170 : vector<2x128xf32>
      %c3_i32 = arith.constant 3 : i32
      %172 = arith.addi %22, %c3_i32 : i32
      %173 = vector.broadcast %172 : i32 to vector<2x1xi32>
      %174 = arith.cmpi slt, %173, %21 : vector<2x1xi32>
      %175 = vector.shape_cast %174 : vector<2x1xi1> to vector<2x1xi1>
      %176 = vector.broadcast %175 : vector<2x1xi1> to vector<2x128xi1>
      %177 = arith.select %176, %169, %138 : vector<2x128xi1>, vector<2x128xf32>
      %178 = vector.shape_cast %174 : vector<2x1xi1> to vector<2x1xi1>
      %179 = vector.broadcast %178 : vector<2x1xi1> to vector<2x128xi1>
      %180 = arith.select %179, %171, %141 : vector<2x128xi1>, vector<2x128xf32>
      %181 = vector.extract_strided_slice %19 {offsets = [0, 4, 0], sizes = [2, 1, 512], strides = [1, 1, 1]} : vector<2x8x512xf32> to vector<2x1x512xf32>
      %182 = vector.shape_cast %181 : vector<2x1x512xf32> to vector<2x512xf32>
      %183 = arith.truncf %180 : vector<2x128xf32> to vector<2x128xbf16>
      %cst_36 = arith.constant dense<0.000000e+00> : vector<2x512xf32>
      %184 = tpu.matmul %183, %20, %cst_36 {dimension_numbers = #tpu.dot_dimension_numbers<[1], [0], [0], [1], [0, 0, 1, 1], [], []>} : vector<2x128xbf16>, vector<128x512xbf16>, vector<2x512xf32> -> vector<2x512xf32>
      %185 = arith.addf %182, %184 : vector<2x512xf32>
      %186 = vector.extract_strided_slice %185 {offsets = [0, 0], sizes = [2, 128], strides = [1, 1]} : vector<2x512xf32> to vector<2x128xf32>
      %187 = arith.negf %186 : vector<2x128xf32>
      %188 = math.exp %187 : vector<2x128xf32>
      %cst_37 = arith.constant 1.000000e+00 : f32
      %189 = vector.broadcast %cst_37 : f32 to vector<2x128xf32>
      %190 = arith.addf %189, %188 : vector<2x128xf32>
      %191 = arith.divf %189, %190 : vector<2x128xf32>
      %192 = vector.extract_strided_slice %185 {offsets = [0, 128], sizes = [2, 128], strides = [1, 1]} : vector<2x512xf32> to vector<2x128xf32>
      %193 = arith.negf %192 : vector<2x128xf32>
      %194 = math.exp %193 : vector<2x128xf32>
      %cst_38 = arith.constant 1.000000e+00 : f32
      %195 = vector.broadcast %cst_38 : f32 to vector<2x128xf32>
      %196 = arith.addf %195, %194 : vector<2x128xf32>
      %197 = arith.divf %195, %196 : vector<2x128xf32>
      %198 = vector.extract_strided_slice %185 {offsets = [0, 256], sizes = [2, 128], strides = [1, 1]} : vector<2x512xf32> to vector<2x128xf32>
      %199 = math.tanh %198 : vector<2x128xf32>
      %200 = vector.extract_strided_slice %185 {offsets = [0, 384], sizes = [2, 128], strides = [1, 1]} : vector<2x512xf32> to vector<2x128xf32>
      %201 = arith.negf %200 : vector<2x128xf32>
      %202 = math.exp %201 : vector<2x128xf32>
      %cst_39 = arith.constant 1.000000e+00 : f32
      %203 = vector.broadcast %cst_39 : f32 to vector<2x128xf32>
      %204 = arith.addf %203, %202 : vector<2x128xf32>
      %205 = arith.divf %203, %204 : vector<2x128xf32>
      %206 = arith.mulf %197, %177 : vector<2x128xf32>
      %207 = arith.mulf %191, %199 : vector<2x128xf32>
      %208 = arith.addf %206, %207 : vector<2x128xf32>
      %209 = math.tanh %208 : vector<2x128xf32>
      %210 = arith.mulf %205, %209 : vector<2x128xf32>
      %c4_i32 = arith.constant 4 : i32
      %211 = arith.addi %22, %c4_i32 : i32
      %212 = vector.broadcast %211 : i32 to vector<2x1xi32>
      %213 = arith.cmpi slt, %212, %21 : vector<2x1xi32>
      %214 = vector.shape_cast %213 : vector<2x1xi1> to vector<2x1xi1>
      %215 = vector.broadcast %214 : vector<2x1xi1> to vector<2x128xi1>
      %216 = arith.select %215, %208, %177 : vector<2x128xi1>, vector<2x128xf32>
      %217 = vector.shape_cast %213 : vector<2x1xi1> to vector<2x1xi1>
      %218 = vector.broadcast %217 : vector<2x1xi1> to vector<2x128xi1>
      %219 = arith.select %218, %210, %180 : vector<2x128xi1>, vector<2x128xf32>
      %220 = vector.extract_strided_slice %19 {offsets = [0, 5, 0], sizes = [2, 1, 512], strides = [1, 1, 1]} : vector<2x8x512xf32> to vector<2x1x512xf32>
      %221 = vector.shape_cast %220 : vector<2x1x512xf32> to vector<2x512xf32>
      %222 = arith.truncf %219 : vector<2x128xf32> to vector<2x128xbf16>
      %cst_40 = arith.constant dense<0.000000e+00> : vector<2x512xf32>
      %223 = tpu.matmul %222, %20, %cst_40 {dimension_numbers = #tpu.dot_dimension_numbers<[1], [0], [0], [1], [0, 0, 1, 1], [], []>} : vector<2x128xbf16>, vector<128x512xbf16>, vector<2x512xf32> -> vector<2x512xf32>
      %224 = arith.addf %221, %223 : vector<2x512xf32>
      %225 = vector.extract_strided_slice %224 {offsets = [0, 0], sizes = [2, 128], strides = [1, 1]} : vector<2x512xf32> to vector<2x128xf32>
      %226 = arith.negf %225 : vector<2x128xf32>
      %227 = math.exp %226 : vector<2x128xf32>
      %cst_41 = arith.constant 1.000000e+00 : f32
      %228 = vector.broadcast %cst_41 : f32 to vector<2x128xf32>
      %229 = arith.addf %228, %227 : vector<2x128xf32>
      %230 = arith.divf %228, %229 : vector<2x128xf32>
      %231 = vector.extract_strided_slice %224 {offsets = [0, 128], sizes = [2, 128], strides = [1, 1]} : vector<2x512xf32> to vector<2x128xf32>
      %232 = arith.negf %231 : vector<2x128xf32>
      %233 = math.exp %232 : vector<2x128xf32>
      %cst_42 = arith.constant 1.000000e+00 : f32
      %234 = vector.broadcast %cst_42 : f32 to vector<2x128xf32>
      %235 = arith.addf %234, %233 : vector<2x128xf32>
      %236 = arith.divf %234, %235 : vector<2x128xf32>
      %237 = vector.extract_strided_slice %224 {offsets = [0, 256], sizes = [2, 128], strides = [1, 1]} : vector<2x512xf32> to vector<2x128xf32>
      %238 = math.tanh %237 : vector<2x128xf32>
      %239 = vector.extract_strided_slice %224 {offsets = [0, 384], sizes = [2, 128], strides = [1, 1]} : vector<2x512xf32> to vector<2x128xf32>
      %240 = arith.negf %239 : vector<2x128xf32>
      %241 = math.exp %240 : vector<2x128xf32>
      %cst_43 = arith.constant 1.000000e+00 : f32
      %242 = vector.broadcast %cst_43 : f32 to vector<2x128xf32>
      %243 = arith.addf %242, %241 : vector<2x128xf32>
      %244 = arith.divf %242, %243 : vector<2x128xf32>
      %245 = arith.mulf %236, %216 : vector<2x128xf32>
      %246 = arith.mulf %230, %238 : vector<2x128xf32>
      %247 = arith.addf %245, %246 : vector<2x128xf32>
      %248 = math.tanh %247 : vector<2x128xf32>
      %249 = arith.mulf %244, %248 : vector<2x128xf32>
      %c5_i32 = arith.constant 5 : i32
      %250 = arith.addi %22, %c5_i32 : i32
      %251 = vector.broadcast %250 : i32 to vector<2x1xi32>
      %252 = arith.cmpi slt, %251, %21 : vector<2x1xi32>
      %253 = vector.shape_cast %252 : vector<2x1xi1> to vector<2x1xi1>
      %254 = vector.broadcast %253 : vector<2x1xi1> to vector<2x128xi1>
      %255 = arith.select %254, %247, %216 : vector<2x128xi1>, vector<2x128xf32>
      %256 = vector.shape_cast %252 : vector<2x1xi1> to vector<2x1xi1>
      %257 = vector.broadcast %256 : vector<2x1xi1> to vector<2x128xi1>
      %258 = arith.select %257, %249, %219 : vector<2x128xi1>, vector<2x128xf32>
      %259 = vector.extract_strided_slice %19 {offsets = [0, 6, 0], sizes = [2, 1, 512], strides = [1, 1, 1]} : vector<2x8x512xf32> to vector<2x1x512xf32>
      %260 = vector.shape_cast %259 : vector<2x1x512xf32> to vector<2x512xf32>
      %261 = arith.truncf %258 : vector<2x128xf32> to vector<2x128xbf16>
      %cst_44 = arith.constant dense<0.000000e+00> : vector<2x512xf32>
      %262 = tpu.matmul %261, %20, %cst_44 {dimension_numbers = #tpu.dot_dimension_numbers<[1], [0], [0], [1], [0, 0, 1, 1], [], []>} : vector<2x128xbf16>, vector<128x512xbf16>, vector<2x512xf32> -> vector<2x512xf32>
      %263 = arith.addf %260, %262 : vector<2x512xf32>
      %264 = vector.extract_strided_slice %263 {offsets = [0, 0], sizes = [2, 128], strides = [1, 1]} : vector<2x512xf32> to vector<2x128xf32>
      %265 = arith.negf %264 : vector<2x128xf32>
      %266 = math.exp %265 : vector<2x128xf32>
      %cst_45 = arith.constant 1.000000e+00 : f32
      %267 = vector.broadcast %cst_45 : f32 to vector<2x128xf32>
      %268 = arith.addf %267, %266 : vector<2x128xf32>
      %269 = arith.divf %267, %268 : vector<2x128xf32>
      %270 = vector.extract_strided_slice %263 {offsets = [0, 128], sizes = [2, 128], strides = [1, 1]} : vector<2x512xf32> to vector<2x128xf32>
      %271 = arith.negf %270 : vector<2x128xf32>
      %272 = math.exp %271 : vector<2x128xf32>
      %cst_46 = arith.constant 1.000000e+00 : f32
      %273 = vector.broadcast %cst_46 : f32 to vector<2x128xf32>
      %274 = arith.addf %273, %272 : vector<2x128xf32>
      %275 = arith.divf %273, %274 : vector<2x128xf32>
      %276 = vector.extract_strided_slice %263 {offsets = [0, 256], sizes = [2, 128], strides = [1, 1]} : vector<2x512xf32> to vector<2x128xf32>
      %277 = math.tanh %276 : vector<2x128xf32>
      %278 = vector.extract_strided_slice %263 {offsets = [0, 384], sizes = [2, 128], strides = [1, 1]} : vector<2x512xf32> to vector<2x128xf32>
      %279 = arith.negf %278 : vector<2x128xf32>
      %280 = math.exp %279 : vector<2x128xf32>
      %cst_47 = arith.constant 1.000000e+00 : f32
      %281 = vector.broadcast %cst_47 : f32 to vector<2x128xf32>
      %282 = arith.addf %281, %280 : vector<2x128xf32>
      %283 = arith.divf %281, %282 : vector<2x128xf32>
      %284 = arith.mulf %275, %255 : vector<2x128xf32>
      %285 = arith.mulf %269, %277 : vector<2x128xf32>
      %286 = arith.addf %284, %285 : vector<2x128xf32>
      %287 = math.tanh %286 : vector<2x128xf32>
      %288 = arith.mulf %283, %287 : vector<2x128xf32>
      %c6_i32 = arith.constant 6 : i32
      %289 = arith.addi %22, %c6_i32 : i32
      %290 = vector.broadcast %289 : i32 to vector<2x1xi32>
      %291 = arith.cmpi slt, %290, %21 : vector<2x1xi32>
      %292 = vector.shape_cast %291 : vector<2x1xi1> to vector<2x1xi1>
      %293 = vector.broadcast %292 : vector<2x1xi1> to vector<2x128xi1>
      %294 = arith.select %293, %286, %255 : vector<2x128xi1>, vector<2x128xf32>
      %295 = vector.shape_cast %291 : vector<2x1xi1> to vector<2x1xi1>
      %296 = vector.broadcast %295 : vector<2x1xi1> to vector<2x128xi1>
      %297 = arith.select %296, %288, %258 : vector<2x128xi1>, vector<2x128xf32>
      %298 = vector.extract_strided_slice %19 {offsets = [0, 7, 0], sizes = [2, 1, 512], strides = [1, 1, 1]} : vector<2x8x512xf32> to vector<2x1x512xf32>
      %299 = vector.shape_cast %298 : vector<2x1x512xf32> to vector<2x512xf32>
      %300 = arith.truncf %297 : vector<2x128xf32> to vector<2x128xbf16>
      %cst_48 = arith.constant dense<0.000000e+00> : vector<2x512xf32>
      %301 = tpu.matmul %300, %20, %cst_48 {dimension_numbers = #tpu.dot_dimension_numbers<[1], [0], [0], [1], [0, 0, 1, 1], [], []>} : vector<2x128xbf16>, vector<128x512xbf16>, vector<2x512xf32> -> vector<2x512xf32>
      %302 = arith.addf %299, %301 : vector<2x512xf32>
      %303 = vector.extract_strided_slice %302 {offsets = [0, 0], sizes = [2, 128], strides = [1, 1]} : vector<2x512xf32> to vector<2x128xf32>
      %304 = arith.negf %303 : vector<2x128xf32>
      %305 = math.exp %304 : vector<2x128xf32>
      %cst_49 = arith.constant 1.000000e+00 : f32
      %306 = vector.broadcast %cst_49 : f32 to vector<2x128xf32>
      %307 = arith.addf %306, %305 : vector<2x128xf32>
      %308 = arith.divf %306, %307 : vector<2x128xf32>
      %309 = vector.extract_strided_slice %302 {offsets = [0, 128], sizes = [2, 128], strides = [1, 1]} : vector<2x512xf32> to vector<2x128xf32>
      %310 = arith.negf %309 : vector<2x128xf32>
      %311 = math.exp %310 : vector<2x128xf32>
      %cst_50 = arith.constant 1.000000e+00 : f32
      %312 = vector.broadcast %cst_50 : f32 to vector<2x128xf32>
      %313 = arith.addf %312, %311 : vector<2x128xf32>
      %314 = arith.divf %312, %313 : vector<2x128xf32>
      %315 = vector.extract_strided_slice %302 {offsets = [0, 256], sizes = [2, 128], strides = [1, 1]} : vector<2x512xf32> to vector<2x128xf32>
      %316 = math.tanh %315 : vector<2x128xf32>
      %317 = vector.extract_strided_slice %302 {offsets = [0, 384], sizes = [2, 128], strides = [1, 1]} : vector<2x512xf32> to vector<2x128xf32>
      %318 = arith.negf %317 : vector<2x128xf32>
      %319 = math.exp %318 : vector<2x128xf32>
      %cst_51 = arith.constant 1.000000e+00 : f32
      %320 = vector.broadcast %cst_51 : f32 to vector<2x128xf32>
      %321 = arith.addf %320, %319 : vector<2x128xf32>
      %322 = arith.divf %320, %321 : vector<2x128xf32>
      %323 = arith.mulf %314, %294 : vector<2x128xf32>
      %324 = arith.mulf %308, %316 : vector<2x128xf32>
      %325 = arith.addf %323, %324 : vector<2x128xf32>
      %326 = math.tanh %325 : vector<2x128xf32>
      %327 = arith.mulf %322, %326 : vector<2x128xf32>
      %c7_i32 = arith.constant 7 : i32
      %328 = arith.addi %22, %c7_i32 : i32
      %329 = vector.broadcast %328 : i32 to vector<2x1xi32>
      %330 = arith.cmpi slt, %329, %21 : vector<2x1xi32>
      %331 = vector.shape_cast %330 : vector<2x1xi1> to vector<2x1xi1>
      %332 = vector.broadcast %331 : vector<2x1xi1> to vector<2x128xi1>
      %333 = arith.select %332, %325, %294 : vector<2x128xi1>, vector<2x128xf32>
      %334 = vector.shape_cast %330 : vector<2x1xi1> to vector<2x1xi1>
      %335 = vector.broadcast %334 : vector<2x1xi1> to vector<2x128xi1>
      %336 = arith.select %335, %327, %297 : vector<2x128xi1>, vector<2x128xf32>
      %c0_52 = arith.constant 0 : index
      %c0_53 = arith.constant 0 : index
      %337 = vector.load %arg9[%c0_52, %c0_53] : memref<2x128xf32, #tpu.memory_space<vmem>>, vector<2x128xf32>
      tpu.vector_store %arg9[%c0_52, %c0_53], %336 {strides = array<i32>} : memref<2x128xf32, #tpu.memory_space<vmem>>, vector<2x128xf32>,
      %c0_54 = arith.constant 0 : index
      %c0_55 = arith.constant 0 : index
      %338 = vector.load %arg10[%c0_54, %c0_55] : memref<2x128xf32, #tpu.memory_space<vmem>>, vector<2x128xf32>
      tpu.vector_store %arg10[%c0_54, %c0_55], %333 {strides = array<i32>} : memref<2x128xf32, #tpu.memory_space<vmem>>, vector<2x128xf32>,
    } else {
    }
    %c0_i32_2 = arith.constant 0 : i32
    %7 = arith.cmpi eq, %arg1, %c0_i32_2 : i32
    %8 = arith.extui %7 : i1 to i32
    %c0_i32_3 = arith.constant 0 : i32
    %9 = arith.cmpi ne, %8, %c0_i32_3 : i32
    scf.if %9 {
      %c0_4 = arith.constant 0 : index
      %c0_5 = arith.constant 0 : index
      %10 = vector.load %arg9[%c0_4, %c0_5] : memref<2x128xf32, #tpu.memory_space<vmem>>, vector<2x128xf32>
      %c0_6 = arith.constant 0 : index
      %c0_7 = arith.constant 0 : index
      %11 = vector.load %arg8[%c0_6, %c0_7] : memref<2x128xf32, #tpu.memory_space<vmem>>, vector<2x128xf32>
      tpu.vector_store %arg8[%c0_6, %c0_7], %10 {strides = array<i32>} : memref<2x128xf32, #tpu.memory_space<vmem>>, vector<2x128xf32>,
    } else {
    }
    return
  }
  func.func @transform_0(%arg0: i32, %arg1: i32, %arg2: memref<1xi32, #tpu.memory_space<smem>>) -> (i32, i32) {
    %c0_i32 = arith.constant 0 : i32
    %c0_i32_0 = arith.constant 0 : i32
    return %arg0, %c0_i32 : i32, i32
  }
  func.func @transform_1(%arg0: i32, %arg1: i32, %arg2: memref<1xi32, #tpu.memory_space<smem>>) -> (i32, i32, i32) {
    %c0 = arith.constant 0 : index
    %0 = memref.load %arg2[%c0] : memref<1xi32, #tpu.memory_space<smem>>
    %c1_i32 = arith.constant 1 : i32
    %1 = arith.subi %0, %c1_i32 : i32
    %2 = arith.minsi %arg1, %1 : i32
    %c0_i32 = arith.constant 0 : i32
    %c0_i32_0 = arith.constant 0 : i32
    return %arg0, %2, %c0_i32 : i32, i32, i32
  }
  func.func @transform_2(%arg0: i32, %arg1: i32, %arg2: memref<1xi32, #tpu.memory_space<smem>>) -> (i32, i32) {
    %c0_i32 = arith.constant 0 : i32
    %c0_i32_0 = arith.constant 0 : i32
    %c0_i32_1 = arith.constant 0 : i32
    return %c0_i32, %c0_i32_0 : i32, i32
  }
  func.func @transform_3(%arg0: i32, %arg1: i32, %arg2: memref<1xi32, #tpu.memory_space<smem>>) -> (i32, i32) {
    %c0_i32 = arith.constant 0 : i32
    %c0_i32_0 = arith.constant 0 : i32
    %c0_i32_1 = arith.constant 0 : i32
    return %c0_i32, %c0_i32_0 : i32, i32
  }
  func.func @transform_4(%arg0: i32, %arg1: i32, %arg2: memref<1xi32, #tpu.memory_space<smem>>) -> (i32, i32) {
    %c0_i32 = arith.constant 0 : i32
    %c0_i32_0 = arith.constant 0 : i32
    %c0_i32_1 = arith.constant 0 : i32
    return %c0_i32, %c0_i32_0 : i32, i32
  }
  func.func @transform_5(%arg0: i32, %arg1: i32, %arg2: memref<1xi32, #tpu.memory_space<smem>>) -> (i32, i32) {
    %c0_i32 = arith.constant 0 : i32
    %c0_i32_0 = arith.constant 0 : i32
    return %arg0, %c0_i32 : i32, i32
  }
}

</mosaic_0001>

<llo_original>
// kernel: tpu_custom_call.1
$region0: #{tpu_custom_call.1}
  #allocation0 [shape = 'u32[]', space=smem, size = 0x4, offset = 0x4, fixed_abs, tag = 'smem constant byte address 0x4 - core index']
  #allocation1 [shape = 'u32[144,128]{1,0:T(1,128)}', space=vmem, size = 0x12000, scoped, tag = 'internal scratch']
  #allocation2 [shape = 'f32[2,128]{1,0:T(2,128)}', space=vmem, size = 0x400, scoped, tag = 'scratch operand']
  #allocation3 [shape = 'f32[2,128]{1,0:T(2,128)}', space=vmem, size = 0x400, scoped, tag = 'scratch operand']
  #allocation4 [shape = 's32[1]{0}', space=sflag, size = 0x4, scoped, tag = 'scoped memory for tpu_custom_call.1']
  #allocation5 [shape = 's32[1]{0:T(128)S(6)}', space=smem, size = 0x200, scoped, tag = 'prefetched SMEM operand 0']
  %s0 = inlined_call_operand.<no memory space> [shape: s32[1], index: 0, kind: input, shape index: {}]
  %s1 = inlined_call_operand.vmem [shape: s32[2,1], index: 1, kind: input, shape index: {}]
  %s2 = inlined_call_operand.hbm [shape: bf16[2,8,16], index: 2, kind: input, shape index: {}]
  %s3 = inlined_call_operand.hbm [shape: bf16[16,512], index: 3, kind: input, shape index: {}]
  %s4 = inlined_call_operand.hbm [shape: bf16[128,512], index: 4, kind: input, shape index: {}]
  %s5 = inlined_call_operand.vmem [shape: f32[1,512], index: 5, kind: input, shape index: {}]
  %s6 = inlined_call_operand.hbm [shape: f32[2,128], index: 6, kind: output, shape index: {}]
  %s7 = sld [smem:[#allocation0]]
  $region54: #{tpu_custom_call.1} parent=0
    _
  %s9 = ssub.s32 1, %s7
  %s10 = scalar_select 0, %s9, %s7
  %11 = sst [smem:[#allocation5]] %s0
  $region1: #{tpu_custom_call.1} parent=0
    #allocation6 [shape = 'u8[4096]{0}', space=vmem, size = 0x1000, scoped, tag = 'input window, operand 2, single buffered']
    #allocation7 [shape = 's32[1]{0}', space=sflag, size = 0x4, scoped, tag = 'scoped memory for tpu_custom_call.1']
    #allocation8 [shape = 's32[1]{0}', space=sflag, size = 0x4, scoped, tag = 'scoped memory for tpu_custom_call.1']
    #allocation9 [shape = 'u8[16384]{0}', space=vmem, size = 0x4000, scoped, tag = 'input window, operand 3, single buffered']
    #allocation10 [shape = 's32[1]{0}', space=sflag, size = 0x4, scoped, tag = 'scoped memory for tpu_custom_call.1']
    #allocation11 [shape = 'u8[131072]{0}', space=vmem, size = 0x20000, scoped, tag = 'input window, operand 4, single buffered']
    #allocation12 [shape = 'u8[1024]{0}', space=vmem, size = 0x400, scoped, tag = 'output window, operand 0, single buffered']
    %12 = vsyncpa [#allocation7], 0
    %13 = vsyncpa [#allocation10], 0
    %14 = vsyncpa [#allocation8], 0
    // Predicated region
    $region2: #{tpu_custom_call.1} parent=1 // pred_check
      _
    $region3: #{tpu_custom_call.1} parent=1 // pred_check_branch
      %16 = sbr.rel (0) target = $region5
    $region4: #{tpu_custom_call.1} parent=1 // pred_region
      _
    $region5: #{tpu_custom_call.1} parent=1 // pred_fallthru
      _
    // Predicated region
    $region6: #{tpu_custom_call.1} parent=1 // pred_check
      _
    $region7: #{tpu_custom_call.1} parent=1 // pred_check_branch
      %18 = sbr.rel (0) target = $region9
    $region8: #{tpu_custom_call.1} parent=1 // pred_region
      %s19 = sld [smem:[#allocation5]]
      %s20 = ssub.s32 %s19, 1
      %p21 = scmp.lt.s32.totalorder 0, %s20
      %s22 = scalar_select %p21, 0, %s20
      %s24 = ssub.s32 128, 128
      %25 = vsyncadd [#allocation7], %s24
      %s26 = smul.addr %s22, 64
      %s27 = scalar_lea.hbm %s2, %s26
      %s28 = sshll.u32 [#allocation6], 4
      %s29 = int_to_ptr.vmem [resolvable:$true] %s28
      %34 = dma.hbm_to_vmem [thread:$0]  %s27, 128, %s29, [#allocation7], 64, 64, 4
    $region9: #{tpu_custom_call.1} parent=1 // pred_fallthru
      _
    // Predicated region
    $region10: #{tpu_custom_call.1} parent=1 // pred_check
      _
    $region11: #{tpu_custom_call.1} parent=1 // pred_check_branch
      %36 = sbr.rel (0) target = $region13
    $region12: #{tpu_custom_call.1} parent=1 // pred_region
      %s38 = ssub.s32 512, 512
      %39 = vsyncadd [#allocation10], %s38
      %s40 = sshll.u32 [#allocation9], 4
      %s41 = int_to_ptr.vmem [resolvable:$true] %s40
      %46 = dma.hbm_to_vmem [thread:$0]  %s3, 512, %s41, [#allocation10], 256, 256, 16
    $region13: #{tpu_custom_call.1} parent=1 // pred_fallthru
      _
    // Predicated region
    $region14: #{tpu_custom_call.1} parent=1 // pred_check
      _
    $region15: #{tpu_custom_call.1} parent=1 // pred_check_branch
      %48 = sbr.rel (0) target = $region17
    $region16: #{tpu_custom_call.1} parent=1 // pred_region
      %s50 = ssub.s32 4096, 4096
      %51 = vsyncadd [#allocation10], %s50
      %s52 = sshll.u32 [#allocation11], 4
      %s53 = int_to_ptr.vmem [resolvable:$true] %s52
      %58 = dma.hbm_to_vmem [thread:$0]  %s4, 4096, %s53, [#allocation10], 256, 256, 16
    $region17: #{tpu_custom_call.1} parent=1 // pred_fallthru
      _
    // Predicated region
    $region18: #{tpu_custom_call.1} parent=1 // pred_check
      _
    $region19: #{tpu_custom_call.1} parent=1 // pred_check_branch
      %60 = sbr.rel (0) target = $region21
    $region20: #{tpu_custom_call.1} parent=1 // pred_region
      _
    $region21: #{tpu_custom_call.1} parent=1 // pred_fallthru
      _
    // Predicated region
    $region22: #{tpu_custom_call.1} parent=1 // pred_check
      _
    $region23: #{tpu_custom_call.1} parent=1 // pred_check_branch
      %62 = sbr.rel (0) target = $region25
    $region24: #{tpu_custom_call.1} parent=1 // pred_region
      %63 = dma.done [#allocation7], 128
    $region25: #{tpu_custom_call.1} parent=1 // pred_fallthru
      _
    // Predicated region
    $region26: #{tpu_custom_call.1} parent=1 // pred_check
      _
    $region27: #{tpu_custom_call.1} parent=1 // pred_check_branch
      %65 = sbr.rel (0) target = $region29
    $region28: #{tpu_custom_call.1} parent=1 // pred_region
      %66 = dma.done [#allocation10], 512
    $region29: #{tpu_custom_call.1} parent=1 // pred_fallthru
      _
    // Predicated region
    $region30: #{tpu_custom_call.1} parent=1 // pred_check
      _
    $region31: #{tpu_custom_call.1} parent=1 // pred_check_branch
      %68 = sbr.rel (0) target = $region33
    $region32: #{tpu_custom_call.1} parent=1 // pred_region
      %69 = dma.done [#allocation10], 4096
    $region33: #{tpu_custom_call.1} parent=1 // pred_fallthru
      _
    %s70 = sld [smem:[#allocation5]]
    %s71 = ssub.s32 %s70, 1
    %p72 = scmp.lt.s32.totalorder 0, %s71
    %s73 = scalar_select %p72, 0, %s71
    %p75 = scmp.eq.s32.totalorder 0, 0
    // Predicated region
    $region34: #{tpu_custom_call.1} parent=1 // pred_check
      %p76 = pneg %p75
    $region35: #{tpu_custom_call.1} parent=1 // pred_check_branch
      %78 = sbr.rel (%p76) target = $region37
    $region36: #{tpu_custom_call.1} parent=1 // pred_region
      %79 = vst [vmem:[#allocation2] sm:$0x3] 0.0
      %80 = vst [vmem:[#allocation3] sm:$0x3] 0.0
    $region37: #{tpu_custom_call.1} parent=1 // pred_fallthru
      _
    %s81 = sld [smem:[#allocation5]]
    %p82 = scmp.lt.s32.totalorder 0, %s81
    // Predicated region
    $region38: #{tpu_custom_call.1} parent=1 // pred_check
      %p83 = pneg %p82
    $region39: #{tpu_custom_call.1} parent=1 // pred_check_branch
      %85 = sbr.rel (%p83) target = $region41
    $region40: #{tpu_custom_call.1} parent=1 // pred_region
      %v86 = vld [vmem:[#allocation6] sm:$0xf]
      %v87 = vld [vmem:[#allocation6 + $0x4] sm:$0xf]
      %v88 = vunpack.c.l.bf16 %v86
      %v89 = vunpack.c.l.bf16 %v87
      %v90 = vpack.c.bf16 %v89, %v88
      %v91 = vld [vmem:[#allocation9] sm:$0xff]
      %v92 = vld [vmem:[#allocation9 + $0x8] sm:$0xff]
      %v93 = vld [vmem:[#allocation9 + $0x10] sm:$0xff]
      %v94 = vld [vmem:[#allocation9 + $0x18] sm:$0xff]
      %v95 = vld [vmem:[%s5] sm:$0xf]
      %v97 = vlaneseq
      %v98 = vshrl.u32 %v97, 7
      %v99 = vsub.s32 0, %v98
      %v100 = vrot.slane %v95, %v99
      %v101 = vlaneseq
      %v102 = vshrl.u32 %v101, 7
      %v103 = vsub.s32 1, %v102
      %v104 = vrot.slane %v95, %v103
      %v105 = vlaneseq
      %v106 = vshrl.u32 %v105, 7
      %v107 = vsub.s32 2, %v106
      %v108 = vrot.slane %v95, %v107
      %v109 = vlaneseq
      %v110 = vshrl.u32 %v109, 7
      %v111 = vsub.s32 3, %v110
      %v112 = vrot.slane %v95, %v111
      %v121 = vunpack.c.l.b16 %v91
      %v122 = vunpack.c.h.b16 %v91
      %v123 = vunpack.c.l.b16 %v92
      %v124 = vunpack.c.h.b16 %v92
      %v125 = vunpack.c.l.b16 %v93
      %v126 = vunpack.c.h.b16 %v93
      %v127 = vunpack.c.l.b16 %v94
      %v128 = vunpack.c.h.b16 %v94
      %v129 = vpack.c.b16 %v125, %v121
      %v130 = vpack.c.b16 %v126, %v122
      %v131 = vpack.c.b16 %v127, %v123
      %v132 = vpack.c.b16 %v128, %v124
      %vm137 = vcmask 130048
      %v139 = vsel %vm137, %v90, 0
      %141 = vmatprep.subr.bf16.mxu0 0
      %142 = vmatpush1.bf16.msra.mxu0 0
      %143 = vmatprep.subr.bf16.mxu0 0
      %144 = vmatpush1.bf16.msra.mxu0 0
      %145 = vmatprep.subr.bf16.mxu0 0
      %146 = vmatpush1.bf16.msra.mxu0 0
      %147 = vmatprep.subr.bf16.mxu0 0
      %148 = vmatpush1.bf16.msra.mxu0 0
      %149 = vmatprep.subr.bf16.mxu0 0
      %150 = vmatpush1.bf16.msra.mxu0 0
      %151 = vmatprep.subr.bf16.mxu0 0
      %152 = vmatpush1.bf16.msra.mxu0 0
      %153 = vmatprep.subr.bf16.mxu0 0
      %154 = vmatpush1.bf16.msra.mxu0 0
      %155 = vmatprep.subr.bf16.mxu0 %v130
      %156 = vmatpush1.bf16.msra.mxu0 %v129
      %157 = vmatprep.subr.bf16.mxu0 0
      %158 = vmatpush2.bf16.msra.mxu0 0
      %159 = vmatprep.subr.bf16.mxu0 0
      %160 = vmatpush2.bf16.msra.mxu0 0
      %161 = vmatprep.subr.bf16.mxu0 0
      %162 = vmatpush2.bf16.msra.mxu0 0
      %163 = vmatprep.subr.bf16.mxu0 0
      %164 = vmatpush2.bf16.msra.mxu0 0
      %165 = vmatprep.subr.bf16.mxu0 0
      %166 = vmatpush2.bf16.msra.mxu0 0
      %167 = vmatprep.subr.bf16.mxu0 0
      %168 = vmatpush2.bf16.msra.mxu0 0
      %169 = vmatprep.subr.bf16.mxu0 0
      %170 = vmatpush2.bf16.msra.mxu0 0
      %171 = vmatprep.subr.bf16.mxu0 0
      %172 = vmatpush2.bf16.msra.mxu0 0
      %173 = vmatprep.mubr.bf16.mxu0 0
      %174 = vmatmul.mubr.bf16.gmra.mxu0 %v139
      %v175 = vpop.f32.mrf.mxu0
      %v176 = vadd.f32 %v100, %v175
      %v177 = vpop.f32.mrf.mxu0
      %v178 = vadd.f32 %v104, %v177
      %v179 = vpop.f32.mrf.mxu0
      %v180 = vadd.f32 %v100, %v179
      %v181 = vpop.f32.mrf.mxu0
      %v182 = vadd.f32 %v104, %v181
      %183 = vdwg.mxu0
      %184 = vmatprep.subr.bf16.mxu0 0
      %185 = vmatpush1.bf16.msra.mxu0 0
      %186 = vmatprep.subr.bf16.mxu0 0
      %187 = vmatpush1.bf16.msra.mxu0 0
      %188 = vmatprep.subr.bf16.mxu0 0
      %189 = vmatpush1.bf16.msra.mxu0 0
      %190 = vmatprep.subr.bf16.mxu0 0
      %191 = vmatpush1.bf16.msra.mxu0 0
      %192 = vmatprep.subr.bf16.mxu0 0
      %193 = vmatpush1.bf16.msra.mxu0 0
      %194 = vmatprep.subr.bf16.mxu0 0
      %195 = vmatpush1.bf16.msra.mxu0 0
      %196 = vmatprep.subr.bf16.mxu0 0
      %197 = vmatpush1.bf16.msra.mxu0 0
      %198 = vmatprep.subr.bf16.mxu0 %v132
      %199 = vmatpush1.bf16.msra.mxu0 %v131
      %200 = vmatprep.subr.bf16.mxu0 0
      %201 = vmatpush2.bf16.msra.mxu0 0
      %202 = vmatprep.subr.bf16.mxu0 0
      %203 = vmatpush2.bf16.msra.mxu0 0
      %204 = vmatprep.subr.bf16.mxu0 0
      %205 = vmatpush2.bf16.msra.mxu0 0
      %206 = vmatprep.subr.bf16.mxu0 0
      %207 = vmatpush2.bf16.msra.mxu0 0
      %208 = vmatprep.subr.bf16.mxu0 0
      %209 = vmatpush2.bf16.msra.mxu0 0
      %210 = vmatprep.subr.bf16.mxu0 0
      %211 = vmatpush2.bf16.msra.mxu0 0
      %212 = vmatprep.subr.bf16.mxu0 0
      %213 = vmatpush2.bf16.msra.mxu0 0
      %214 = vmatprep.subr.bf16.mxu0 0
      %215 = vmatpush2.bf16.msra.mxu0 0
      %216 = vmatprep.mubr.bf16.mxu0 0
      %217 = vmatmul.mubr.bf16.gmra.mxu0 %v139
      %v218 = vpop.f32.mrf.mxu0
      %v219 = vadd.f32 %v108, %v218
      %v220 = vpop.f32.mrf.mxu0
      %v221 = vadd.f32 %v112, %v220
      %v222 = vpop.f32.mrf.mxu0
      %v223 = vadd.f32 %v108, %v222
      %v224 = vpop.f32.mrf.mxu0
      %v225 = vadd.f32 %v112, %v224
      %226 = vdwg.mxu0
      %v227 = vld [vmem:[#allocation11] sm:$0xff]
      %v228 = vld [vmem:[#allocation11 + $0x8] sm:$0xff]
      %v229 = vld [vmem:[#allocation11 + $0x10] sm:$0xff]
      %v230 = vld [vmem:[#allocation11 + $0x18] sm:$0xff]
      %v231 = vld [vmem:[#allocation11 + $0x20] sm:$0xff]
      %v232 = vld [vmem:[#allocation11 + $0x28] sm:$0xff]
      %v233 = vld [vmem:[#allocation11 + $0x30] sm:$0xff]
      %v234 = vld [vmem:[#allocation11 + $0x38] sm:$0xff]
      %v235 = vld [vmem:[#allocation11 + $0x40] sm:$0xff]
      %v236 = vld [vmem:[#allocation11 + $0x48] sm:$0xff]
      %v237 = vld [vmem:[#allocation11 + $0x50] sm:$0xff]
      %v238 = vld [vmem:[#allocation11 + $0x58] sm:$0xff]
      %v239 = vld [vmem:[#allocation11 + $0x60] sm:$0xff]
      %v240 = vld [vmem:[#allocation11 + $0x68] sm:$0xff]
      %v241 = vld [vmem:[#allocation11 + $0x70] sm:$0xff]
      %v242 = vld [vmem:[#allocation11 + $0x78] sm:$0xff]
      %v243 = vld [vmem:[#allocation11 + $0x80] sm:$0xff]
      %v244 = vld [vmem:[#allocation11 + $0x88] sm:$0xff]
      %v245 = vld [vmem:[#allocation11 + $0x90] sm:$0xff]
      %v246 = vld [vmem:[#allocation11 + $0x98] sm:$0xff]
      %v247 = vld [vmem:[#allocation11 + $0xa0] sm:$0xff]
      %v248 = vld [vmem:[#allocation11 + $0xa8] sm:$0xff]
      %v249 = vld [vmem:[#allocation11 + $0xb0] sm:$0xff]
      %v250 = vld [vmem:[#allocation11 + $0xb8] sm:$0xff]
      %v251 = vld [vmem:[#allocation11 + $0xc0] sm:$0xff]
      %v252 = vld [vmem:[#allocation11 + $0xc8] sm:$0xff]
      %v253 = vld [vmem:[#allocation11 + $0xd0] sm:$0xff]
      %v254 = vld [vmem:[#allocation11 + $0xd8] sm:$0xff]
      %v255 = vld [vmem:[#allocation11 + $0xe0] sm:$0xff]
      %v256 = vld [vmem:[#allocation11 + $0xe8] sm:$0xff]
      %v257 = vld [vmem:[#allocation11 + $0xf0] sm:$0xff]
      %v258 = vld [vmem:[#allocation11 + $0xf8] sm:$0xff]
      %v259 = vld [vmem:[%s1] sm:$0x3]
      %s260 = smul.u32 0, 8
      %v261 = vld [vmem:[#allocation2] sm:$0x3]
      %v262 = vld [vmem:[#allocation3] sm:$0x3]
      %v263 = vpack.c.bf16 %v261, %v261
      %v296 = vunpack.c.l.b16 %v227
      %v297 = vunpack.c.h.b16 %v227
      %v298 = vunpack.c.l.b16 %v228
      %v299 = vunpack.c.h.b16 %v228
      %v300 = vunpack.c.l.b16 %v229
      %v301 = vunpack.c.h.b16 %v229
      %v302 = vunpack.c.l.b16 %v230
      %v303 = vunpack.c.h.b16 %v230
      %v304 = vunpack.c.l.b16 %v231
      %v305 = vunpack.c.h.b16 %v231
      %v306 = vunpack.c.l.b16 %v232
      %v307 = vunpack.c.h.b16 %v232
      %v308 = vunpack.c.l.b16 %v233
      %v309 = vunpack.c.h.b16 %v233
      %v310 = vunpack.c.l.b16 %v234
      %v311 = vunpack.c.h.b16 %v234
      %v312 = vunpack.c.l.b16 %v235
      %v313 = vunpack.c.h.b16 %v235
      %v314 = vunpack.c.l.b16 %v236
      %v315 = vunpack.c.h.b16 %v236
      %v316 = vunpack.c.l.b16 %v237
      %v317 = vunpack.c.h.b16 %v237
      %v318 = vunpack.c.l.b16 %v238
      %v319 = vunpack.c.h.b16 %v238
      %v320 = vunpack.c.l.b16 %v239
      %v321 = vunpack.c.h.b16 %v239
      %v322 = vunpack.c.l.b16 %v240
      %v323 = vunpack.c.h.b16 %v240
      %v324 = vunpack.c.l.b16 %v241
      %v325 = vunpack.c.h.b16 %v241
      %v326 = vunpack.c.l.b16 %v242
      %v327 = vunpack.c.h.b16 %v242
      %v328 = vunpack.c.l.b16 %v243
      %v329 = vunpack.c.h.b16 %v243
      %v330 = vunpack.c.l.b16 %v244
      %v331 = vunpack.c.h.b16 %v244
      %v332 = vunpack.c.l.b16 %v245
      %v333 = vunpack.c.h.b16 %v245
      %v334 = vunpack.c.l.b16 %v246
      %v335 = vunpack.c.h.b16 %v246
      %v336 = vunpack.c.l.b16 %v247
      %v337 = vunpack.c.h.b16 %v247
      %v338 = vunpack.c.l.b16 %v248
      %v339 = vunpack.c.h.b16 %v248
      %v340 = vunpack.c.l.b16 %v249
      %v341 = vunpack.c.h.b16 %v249
      %v342 = vunpack.c.l.b16 %v250
      %v343 = vunpack.c.h.b16 %v250
      %v344 = vunpack.c.l.b16 %v251
      %v345 = vunpack.c.h.b16 %v251
      %v346 = vunpack.c.l.b16 %v252
      %v347 = vunpack.c.h.b16 %v252
      %v348 = vunpack.c.l.b16 %v253
      %v349 = vunpack.c.h.b16 %v253
      %v350 = vunpack.c.l.b16 %v254
      %v351 = vunpack.c.h.b16 %v254
      %v352 = vunpack.c.l.b16 %v255
      %v353 = vunpack.c.h.b16 %v255
      %v354 = vunpack.c.l.b16 %v256
      %v355 = vunpack.c.h.b16 %v256
      %v356 = vunpack.c.l.b16 %v257
      %v357 = vunpack.c.h.b16 %v257
      %v358 = vunpack.c.l.b16 %v258
      %v359 = vunpack.c.h.b16 %v258
      %v360 = vpack.c.b16 %v300, %v296
      %v361 = vpack.c.b16 %v301, %v297
      %v362 = vpack.c.b16 %v302, %v298
      %v363 = vpack.c.b16 %v303, %v299
      %v364 = vpack.c.b16 %v308, %v304
      %v365 = vpack.c.b16 %v309, %v305
      %v366 = vpack.c.b16 %v310, %v306
      %v367 = vpack.c.b16 %v311, %v307
      %v368 = vpack.c.b16 %v316, %v312
      %v369 = vpack.c.b16 %v317, %v313
      %v370 = vpack.c.b16 %v318, %v314
      %v371 = vpack.c.b16 %v319, %v315
      %v372 = vpack.c.b16 %v324, %v320
      %v373 = vpack.c.b16 %v325, %v321
      %v374 = vpack.c.b16 %v326, %v322
      %v375 = vpack.c.b16 %v327, %v323
      %v376 = vpack.c.b16 %v332, %v328
      %v377 = vpack.c.b16 %v333, %v329
      %v378 = vpack.c.b16 %v334, %v330
      %v379 = vpack.c.b16 %v335, %v331
      %v380 = vpack.c.b16 %v340, %v336
      %v381 = vpack.c.b16 %v341, %v337
      %v382 = vpack.c.b16 %v342, %v338
      %v383 = vpack.c.b16 %v343, %v339
      %v384 = vpack.c.b16 %v348, %v344
      %v385 = vpack.c.b16 %v349, %v345
      %v386 = vpack.c.b16 %v350, %v346
      %v387 = vpack.c.b16 %v351, %v347
      %v388 = vpack.c.b16 %v356, %v352
      %v389 = vpack.c.b16 %v357, %v353
      %v390 = vpack.c.b16 %v358, %v354
      %v391 = vpack.c.b16 %v359, %v355
      %424 = vmatprep.subr.bf16.mxu0 %v389
      %425 = vmatpush1.bf16.msra.mxu0 %v388
      %426 = vmatprep.subr.bf16.mxu0 %v385
      %427 = vmatpush1.bf16.msra.mxu0 %v384
      %428 = vmatprep.subr.bf16.mxu0 %v381
      %429 = vmatpush1.bf16.msra.mxu0 %v380
      %430 = vmatprep.subr.bf16.mxu0 %v377
      %431 = vmatpush1.bf16.msra.mxu0 %v376
      %432 = vmatprep.subr.bf16.mxu0 %v373
      %433 = vmatpush1.bf16.msra.mxu0 %v372
      %434 = vmatprep.subr.bf16.mxu0 %v369
      %435 = vmatpush1.bf16.msra.mxu0 %v368
      %436 = vmatprep.subr.bf16.mxu0 %v365
      %437 = vmatpush1.bf16.msra.mxu0 %v364
      %438 = vmatprep.subr.bf16.mxu0 %v361
      %439 = vmatpush1.bf16.msra.mxu0 %v360
      %440 = vmatprep.subr.bf16.mxu0 0
      %441 = vmatpush2.bf16.msra.mxu0 0
      %442 = vmatprep.subr.bf16.mxu0 0
      %443 = vmatpush2.bf16.msra.mxu0 0
      %444 = vmatprep.subr.bf16.mxu0 0
      %445 = vmatpush2.bf16.msra.mxu0 0
      %446 = vmatprep.subr.bf16.mxu0 0
      %447 = vmatpush2.bf16.msra.mxu0 0
      %448 = vmatprep.subr.bf16.mxu0 0
      %449 = vmatpush2.bf16.msra.mxu0 0
      %450 = vmatprep.subr.bf16.mxu0 0
      %451 = vmatpush2.bf16.msra.mxu0 0
      %452 = vmatprep.subr.bf16.mxu0 0
      %453 = vmatpush2.bf16.msra.mxu0 0
      %454 = vmatprep.subr.bf16.mxu0 0
      %455 = vmatpush2.bf16.msra.mxu0 0
      %456 = vmatprep.mubr.bf16.mxu0 0
      %457 = vmatmul.mubr.bf16.gmra.mxu0 %v263
      %v458 = vpop.f32.mrf.mxu0
      %v459 = vadd.f32 0.0, %v458
      %v460 = vpop.f32.mrf.mxu0
      %v461 = vadd.f32 0.0, %v460
      %v462 = vpop.f32.mrf.mxu0
      %v463 = vpop.f32.mrf.mxu0
      %464 = vdwg.mxu0
      %465 = vmatprep.subr.bf16.mxu0 %v391
      %466 = vmatpush1.bf16.msra.mxu0 %v390
      %467 = vmatprep.subr.bf16.mxu0 %v387
      %468 = vmatpush1.bf16.msra.mxu0 %v386
      %469 = vmatprep.subr.bf16.mxu0 %v383
      %470 = vmatpush1.bf16.msra.mxu0 %v382
      %471 = vmatprep.subr.bf16.mxu0 %v379
      %472 = vmatpush1.bf16.msra.mxu0 %v378
      %473 = vmatprep.subr.bf16.mxu0 %v375
      %474 = vmatpush1.bf16.msra.mxu0 %v374
      %475 = vmatprep.subr.bf16.mxu0 %v371
      %476 = vmatpush1.bf16.msra.mxu0 %v370
      %477 = vmatprep.subr.bf16.mxu0 %v367
      %478 = vmatpush1.bf16.msra.mxu0 %v366
      %479 = vmatprep.subr.bf16.mxu0 %v363
      %480 = vmatpush1.bf16.msra.mxu0 %v362
      %481 = vmatprep.subr.bf16.mxu0 0
      %482 = vmatpush2.bf16.msra.mxu0 0
      %483 = vmatprep.subr.bf16.mxu0 0
      %484 = vmatpush2.bf16.msra.mxu0 0
      %485 = vmatprep.subr.bf16.mxu0 0
      %486 = vmatpush2.bf16.msra.mxu0 0
      %487 = vmatprep.subr.bf16.mxu0 0
      %488 = vmatpush2.bf16.msra.mxu0 0
      %489 = vmatprep.subr.bf16.mxu0 0
      %490 = vmatpush2.bf16.msra.mxu0 0
      %491 = vmatprep.subr.bf16.mxu0 0
      %492 = vmatpush2.bf16.msra.mxu0 0
      %493 = vmatprep.subr.bf16.mxu0 0
      %494 = vmatpush2.bf16.msra.mxu0 0
      %495 = vmatprep.subr.bf16.mxu0 0
      %496 = vmatpush2.bf16.msra.mxu0 0
      %497 = vmatprep.mubr.bf16.mxu0 0
      %498 = vmatmul.mubr.bf16.gmra.mxu0 %v263
      %v499 = vpop.f32.mrf.mxu0
      %v500 = vadd.f32 0.0, %v499
      %v501 = vpop.f32.mrf.mxu0
      %v502 = vadd.f32 0.0, %v501
      %v503 = vpop.f32.mrf.mxu0
      %v504 = vpop.f32.mrf.mxu0
      %505 = vdwg.mxu0
      %v510 = vrot.slane %v459, 1
      %v511 = vrot.slane %v461, 1
      %v512 = vrot.slane %v500, 1
      %v513 = vrot.slane %v502, 1
      %v522 = vadd.f32 %v176, %v459
      %v523 = vadd.f32 %v178, %v461
      %v524 = vadd.f32 %v219, %v500
      %v525 = vadd.f32 %v221, %v502
      %v526 = vadd.f32 %v180, %v510
      %v527 = vadd.f32 %v182, %v511
      %v528 = vadd.f32 %v223, %v512
      %v529 = vadd.f32 %v225, %v513
      %v530 = vxor.u32 %v522, 2147483648
      %v531 = vxor.u32 %v526, 2147483648
      %v532 = vmul.f32 %v530, 1.442695
      %v533 = vpow.pop %v532
      %v534 = vmul.f32 %v531, 1.442695
      %v535 = vpow.pop %v534
      %v536 = vadd.f32 %v533, 1.0
      %v537 = vadd.f32 %v535, 1.0
      %v538 = vrcp.pop %v536
      %v539 = vmul.f32 1.0, %v538
      %v540 = vrcp.pop %v537
      %v541 = vmul.f32 1.0, %v540
      %v542 = vxor.u32 %v523, 2147483648
      %v543 = vxor.u32 %v527, 2147483648
      %v544 = vmul.f32 %v542, 1.442695
      %v545 = vpow.pop %v544
      %v546 = vmul.f32 %v543, 1.442695
      %v547 = vpow.pop %v546
      %v548 = vadd.f32 %v545, 1.0
      %v549 = vadd.f32 %v547, 1.0
      %v550 = vrcp.pop %v548
      %v551 = vmul.f32 1.0, %v550
      %v552 = vrcp.pop %v549
      %v553 = vmul.f32 1.0, %v552
      %v554 = vtanh.pop %v524
      %v555 = vtanh.pop %v528
      %v556 = vxor.u32 %v525, 2147483648
      %v557 = vxor.u32 %v529, 2147483648
      %v558 = vmul.f32 %v556, 1.442695
      %v559 = vpow.pop %v558
      %v560 = vmul.f32 %v557, 1.442695
      %v561 = vpow.pop %v560
      %v562 = vadd.f32 %v559, 1.0
      %v563 = vadd.f32 %v561, 1.0
      %v564 = vrcp.pop %v562
      %v565 = vmul.f32 1.0, %v564
      %v566 = vrcp.pop %v563
      %v567 = vmul.f32 1.0, %v566
      %v569 = vrot.slane %v262, 1
      %v572 = vmul.f32 %v551, %v262
      %v573 = vmul.f32 %v553, %v569
      %v574 = vmul.f32 %v539, %v554
      %v575 = vmul.f32 %v541, %v555
      %v576 = vadd.f32 %v572, %v574
      %v577 = vadd.f32 %v573, %v575
      %v578 = vtanh.pop %v576
      %v579 = vtanh.pop %v577
      %v580 = vmul.f32 %v565, %v578
      %v581 = vmul.f32 %v567, %v579
      %v582 = vstv %s260
      %vm583 = vcmp.lt.s32.totalorder %v582, %v259
      %v584 = vsel %vm583, 1, 0
      %585 = vset.pattern.permute.xlu0 0
      %586 = vperm.xlu0 %585, %v584
      %v587 = vpop.permute.xlu0 %586
      %vm588 = vcmp.eq.s32.totalorder %v587, 1
      %v591 = vrot.slane %v577, 7
      %vm592 = vcmask 1041409
      %v593 = vsel %vm592, %v591, %v576
      %v595 = vsel %vm588, %v593, %v262
      %v598 = vrot.slane %v581, 7
      %v599 = vsel %vm592, %v598, %v580
      %v601 = vsel %vm588, %v599, %v261
      %v602 = vpack.c.bf16 %v601, %v601
      %603 = vmatprep.subr.bf16.mxu0 %v389
      %604 = vmatpush1.bf16.msra.mxu0 %v388
      %605 = vmatprep.subr.bf16.mxu0 %v385
      %606 = vmatpush1.bf16.msra.mxu0 %v384
      %607 = vmatprep.subr.bf16.mxu0 %v381
      %608 = vmatpush1.bf16.msra.mxu0 %v380
      %609 = vmatprep.subr.bf16.mxu0 %v377
      %610 = vmatpush1.bf16.msra.mxu0 %v376
      %611 = vmatprep.subr.bf16.mxu0 %v373
      %612 = vmatpush1.bf16.msra.mxu0 %v372
      %613 = vmatprep.subr.bf16.mxu0 %v369
      %614 = vmatpush1.bf16.msra.mxu0 %v368
      %615 = vmatprep.subr.bf16.mxu0 %v365
      %616 = vmatpush1.bf16.msra.mxu0 %v364
      %617 = vmatprep.subr.bf16.mxu0 %v361
      %618 = vmatpush1.bf16.msra.mxu0 %v360
      %619 = vmatprep.subr.bf16.mxu0 0
      %620 = vmatpush2.bf16.msra.mxu0 0
      %621 = vmatprep.subr.bf16.mxu0 0
      %622 = vmatpush2.bf16.msra.mxu0 0
      %623 = vmatprep.subr.bf16.mxu0 0
      %624 = vmatpush2.bf16.msra.mxu0 0
      %625 = vmatprep.subr.bf16.mxu0 0
      %626 = vmatpush2.bf16.msra.mxu0 0
      %627 = vmatprep.subr.bf16.mxu0 0
      %628 = vmatpush2.bf16.msra.mxu0 0
      %629 = vmatprep.subr.bf16.mxu0 0
      %630 = vmatpush2.bf16.msra.mxu0 0
      %631 = vmatprep.subr.bf16.mxu0 0
      %632 = vmatpush2.bf16.msra.mxu0 0
      %633 = vmatprep.subr.bf16.mxu0 0
      %634 = vmatpush2.bf16.msra.mxu0 0
      %635 = vmatprep.mubr.bf16.mxu0 0
      %636 = vmatmul.mubr.bf16.gmra.mxu0 %v602
      %v637 = vpop.f32.mrf.mxu0
      %v638 = vadd.f32 0.0, %v637
      %v639 = vpop.f32.mrf.mxu0
      %v640 = vadd.f32 0.0, %v639
      %v641 = vpop.f32.mrf.mxu0
      %v642 = vpop.f32.mrf.mxu0
      %643 = vdwg.mxu0
      %644 = vmatprep.subr.bf16.mxu0 %v391
      %645 = vmatpush1.bf16.msra.mxu0 %v390
      %646 = vmatprep.subr.bf16.mxu0 %v387
      %647 = vmatpush1.bf16.msra.mxu0 %v386
      %648 = vmatprep.subr.bf16.mxu0 %v383
      %649 = vmatpush1.bf16.msra.mxu0 %v382
      %650 = vmatprep.subr.bf16.mxu0 %v379
      %651 = vmatpush1.bf16.msra.mxu0 %v378
      %652 = vmatprep.subr.bf16.mxu0 %v375
      %653 = vmatpush1.bf16.msra.mxu0 %v374
      %654 = vmatprep.subr.bf16.mxu0 %v371
      %655 = vmatpush1.bf16.msra.mxu0 %v370
      %656 = vmatprep.subr.bf16.mxu0 %v367
      %657 = vmatpush1.bf16.msra.mxu0 %v366
      %658 = vmatprep.subr.bf16.mxu0 %v363
      %659 = vmatpush1.bf16.msra.mxu0 %v362
      %660 = vmatprep.subr.bf16.mxu0 0
      %661 = vmatpush2.bf16.msra.mxu0 0
      %662 = vmatprep.subr.bf16.mxu0 0
      %663 = vmatpush2.bf16.msra.mxu0 0
      %664 = vmatprep.subr.bf16.mxu0 0
      %665 = vmatpush2.bf16.msra.mxu0 0
      %666 = vmatprep.subr.bf16.mxu0 0
      %667 = vmatpush2.bf16.msra.mxu0 0
      %668 = vmatprep.subr.bf16.mxu0 0
      %669 = vmatpush2.bf16.msra.mxu0 0
      %670 = vmatprep.subr.bf16.mxu0 0
      %671 = vmatpush2.bf16.msra.mxu0 0
      %672 = vmatprep.subr.bf16.mxu0 0
      %673 = vmatpush2.bf16.msra.mxu0 0
      %674 = vmatprep.subr.bf16.mxu0 0
      %675 = vmatpush2.bf16.msra.mxu0 0
      %676 = vmatprep.mubr.bf16.mxu0 0
      %677 = vmatmul.mubr.bf16.gmra.mxu0 %v602
      %v678 = vpop.f32.mrf.mxu0
      %v679 = vadd.f32 0.0, %v678
      %v680 = vpop.f32.mrf.mxu0
      %v681 = vadd.f32 0.0, %v680
      %v682 = vpop.f32.mrf.mxu0
      %v683 = vpop.f32.mrf.mxu0
      %684 = vdwg.mxu0
      %v689 = vrot.slane %v638, 7
      %v690 = vrot.slane %v640, 7
      %v691 = vrot.slane %v679, 7
      %v692 = vrot.slane %v681, 7
      %v701 = vadd.f32 %v176, %v689
      %v702 = vadd.f32 %v178, %v690
      %v703 = vadd.f32 %v219, %v691
      %v704 = vadd.f32 %v221, %v692
      %v705 = vadd.f32 %v180, %v638
      %v706 = vadd.f32 %v182, %v640
      %v707 = vadd.f32 %v223, %v679
      %v708 = vadd.f32 %v225, %v681
      %v709 = vxor.u32 %v701, 2147483648
      %v710 = vxor.u32 %v705, 2147483648
      %v711 = vmul.f32 %v709, 1.442695
      %v712 = vpow.pop %v711
      %v713 = vmul.f32 %v710, 1.442695
      %v714 = vpow.pop %v713
      %v715 = vadd.f32 %v712, 1.0
      %v716 = vadd.f32 %v714, 1.0
      %v717 = vrcp.pop %v715
      %v718 = vmul.f32 1.0, %v717
      %v719 = vrcp.pop %v716
      %v720 = vmul.f32 1.0, %v719
      %v721 = vxor.u32 %v702, 2147483648
      %v722 = vxor.u32 %v706, 2147483648
      %v723 = vmul.f32 %v721, 1.442695
      %v724 = vpow.pop %v723
      %v725 = vmul.f32 %v722, 1.442695
      %v726 = vpow.pop %v725
      %v727 = vadd.f32 %v724, 1.0
      %v728 = vadd.f32 %v726, 1.0
      %v729 = vrcp.pop %v727
      %v730 = vmul.f32 1.0, %v729
      %v731 = vrcp.pop %v728
      %v732 = vmul.f32 1.0, %v731
      %v733 = vtanh.pop %v703
      %v734 = vtanh.pop %v707
      %v735 = vxor.u32 %v704, 2147483648
      %v736 = vxor.u32 %v708, 2147483648
      %v737 = vmul.f32 %v735, 1.442695
      %v738 = vpow.pop %v737
      %v739 = vmul.f32 %v736, 1.442695
      %v740 = vpow.pop %v739
      %v741 = vadd.f32 %v738, 1.0
      %v742 = vadd.f32 %v740, 1.0
      %v743 = vrcp.pop %v741
      %v744 = vmul.f32 1.0, %v743
      %v745 = vrcp.pop %v742
      %v746 = vmul.f32 1.0, %v745
      %v748 = vrot.slane %v595, 7
      %v751 = vmul.f32 %v730, %v748
      %v752 = vmul.f32 %v732, %v595
      %v753 = vmul.f32 %v718, %v733
      %v754 = vmul.f32 %v720, %v734
      %v755 = vadd.f32 %v751, %v753
      %v756 = vadd.f32 %v752, %v754
      %v757 = vtanh.pop %v755
      %v758 = vtanh.pop %v756
      %v759 = vmul.f32 %v744, %v757
      %v760 = vmul.f32 %v746, %v758
      %s761 = sadd.s32 %s260, 1
      %v762 = vstv %s761
      %vm763 = vcmp.lt.s32.totalorder %v762, %v259
      %v764 = vsel %vm763, 1, 0
      %765 = vset.pattern.permute.xlu0 0
      %766 = vperm.xlu0 %765, %v764
      %v767 = vpop.permute.xlu0 %766
      %vm768 = vcmp.eq.s32.totalorder %v767, 1
      %v771 = vrot.slane %v755, 1
      %v772 = vsel %vm592, %v756, %v771
      %v774 = vsel %vm768, %v772, %v595
      %v777 = vrot.slane %v759, 1
      %v778 = vsel %vm592, %v760, %v777
      %v780 = vsel %vm768, %v778, %v601
      %v781 = vpack.c.bf16 %v780, %v780
      %782 = vmatprep.subr.bf16.mxu0 %v389
      %783 = vmatpush1.bf16.msra.mxu0 %v388
      %784 = vmatprep.subr.bf16.mxu0 %v385
      %785 = vmatpush1.bf16.msra.mxu0 %v384
      %786 = vmatprep.subr.bf16.mxu0 %v381
      %787 = vmatpush1.bf16.msra.mxu0 %v380
      %788 = vmatprep.subr.bf16.mxu0 %v377
      %789 = vmatpush1.bf16.msra.mxu0 %v376
      %790 = vmatprep.subr.bf16.mxu0 %v373
      %791 = vmatpush1.bf16.msra.mxu0 %v372
      %792 = vmatprep.subr.bf16.mxu0 %v369
      %793 = vmatpush1.bf16.msra.mxu0 %v368
      %794 = vmatprep.subr.bf16.mxu0 %v365
      %795 = vmatpush1.bf16.msra.mxu0 %v364
      %796 = vmatprep.subr.bf16.mxu0 %v361
      %797 = vmatpush1.bf16.msra.mxu0 %v360
      %798 = vmatprep.subr.bf16.mxu0 0
      %799 = vmatpush2.bf16.msra.mxu0 0
      %800 = vmatprep.subr.bf16.mxu0 0
      %801 = vmatpush2.bf16.msra.mxu0 0
      %802 = vmatprep.subr.bf16.mxu0 0
      %803 = vmatpush2.bf16.msra.mxu0 0
      %804 = vmatprep.subr.bf16.mxu0 0
      %805 = vmatpush2.bf16.msra.mxu0 0
      %806 = vmatprep.subr.bf16.mxu0 0
      %807 = vmatpush2.bf16.msra.mxu0 0
      %808 = vmatprep.subr.bf16.mxu0 0
      %809 = vmatpush2.bf16.msra.mxu0 0
      %810 = vmatprep.subr.bf16.mxu0 0
      %811 = vmatpush2.bf16.msra.mxu0 0
      %812 = vmatprep.subr.bf16.mxu0 0
      %813 = vmatpush2.bf16.msra.mxu0 0
      %814 = vmatprep.mubr.bf16.mxu0 0
      %815 = vmatmul.mubr.bf16.gmra.mxu0 %v781
      %v816 = vpop.f32.mrf.mxu0
      %v817 = vadd.f32 0.0, %v816
      %v818 = vpop.f32.mrf.mxu0
      %v819 = vadd.f32 0.0, %v818
      %v820 = vpop.f32.mrf.mxu0
      %v821 = vpop.f32.mrf.mxu0
      %822 = vdwg.mxu0
      %823 = vmatprep.subr.bf16.mxu0 %v391
      %824 = vmatpush1.bf16.msra.mxu0 %v390
      %825 = vmatprep.subr.bf16.mxu0 %v387
      %826 = vmatpush1.bf16.msra.mxu0 %v386
      %827 = vmatprep.subr.bf16.mxu0 %v383
      %828 = vmatpush1.bf16.msra.mxu0 %v382
      %829 = vmatprep.subr.bf16.mxu0 %v379
      %830 = vmatpush1.bf16.msra.mxu0 %v378
      %831 = vmatprep.subr.bf16.mxu0 %v375
      %832 = vmatpush1.bf16.msra.mxu0 %v374
      %833 = vmatprep.subr.bf16.mxu0 %v371
      %834 = vmatpush1.bf16.msra.mxu0 %v370
      %835 = vmatprep.subr.bf16.mxu0 %v367
      %836 = vmatpush1.bf16.msra.mxu0 %v366
      %837 = vmatprep.subr.bf16.mxu0 %v363
      %838 = vmatpush1.bf16.msra.mxu0 %v362
      %839 = vmatprep.subr.bf16.mxu0 0
      %840 = vmatpush2.bf16.msra.mxu0 0
      %841 = vmatprep.subr.bf16.mxu0 0
      %842 = vmatpush2.bf16.msra.mxu0 0
      %843 = vmatprep.subr.bf16.mxu0 0
      %844 = vmatpush2.bf16.msra.mxu0 0
      %845 = vmatprep.subr.bf16.mxu0 0
      %846 = vmatpush2.bf16.msra.mxu0 0
      %847 = vmatprep.subr.bf16.mxu0 0
      %848 = vmatpush2.bf16.msra.mxu0 0
      %849 = vmatprep.subr.bf16.mxu0 0
      %850 = vmatpush2.bf16.msra.mxu0 0
      %851 = vmatprep.subr.bf16.mxu0 0
      %852 = vmatpush2.bf16.msra.mxu0 0
      %853 = vmatprep.subr.bf16.mxu0 0
      %854 = vmatpush2.bf16.msra.mxu0 0
      %855 = vmatprep.mubr.bf16.mxu0 0
      %856 = vmatmul.mubr.bf16.gmra.mxu0 %v781
      %v857 = vpop.f32.mrf.mxu0
      %v858 = vadd.f32 0.0, %v857
      %v859 = vpop.f32.mrf.mxu0
      %v860 = vadd.f32 0.0, %v859
      %v861 = vpop.f32.mrf.mxu0
      %v862 = vpop.f32.mrf.mxu0
      %863 = vdwg.mxu0
      %v868 = vrot.slane %v817, 6
      %v869 = vrot.slane %v819, 6
      %v870 = vrot.slane %v858, 6
      %v871 = vrot.slane %v860, 6
      %v872 = vrot.slane %v817, 7
      %v873 = vrot.slane %v819, 7
      %v874 = vrot.slane %v858, 7
      %v875 = vrot.slane %v860, 7
      %v884 = vadd.f32 %v176, %v868
      %v885 = vadd.f32 %v178, %v869
      %v886 = vadd.f32 %v219, %v870
      %v887 = vadd.f32 %v221, %v871
      %v888 = vadd.f32 %v180, %v872
      %v889 = vadd.f32 %v182, %v873
      %v890 = vadd.f32 %v223, %v874
      %v891 = vadd.f32 %v225, %v875
      %v892 = vxor.u32 %v884, 2147483648
      %v893 = vxor.u32 %v888, 2147483648
      %v894 = vmul.f32 %v892, 1.442695
      %v895 = vpow.pop %v894
      %v896 = vmul.f32 %v893, 1.442695
      %v897 = vpow.pop %v896
      %v898 = vadd.f32 %v895, 1.0
      %v899 = vadd.f32 %v897, 1.0
      %v900 = vrcp.pop %v898
      %v901 = vmul.f32 1.0, %v900
      %v902 = vrcp.pop %v899
      %v903 = vmul.f32 1.0, %v902
      %v904 = vxor.u32 %v885, 2147483648
      %v905 = vxor.u32 %v889, 2147483648
      %v906 = vmul.f32 %v904, 1.442695
      %v907 = vpow.pop %v906
      %v908 = vmul.f32 %v905, 1.442695
      %v909 = vpow.pop %v908
      %v910 = vadd.f32 %v907, 1.0
      %v911 = vadd.f32 %v909, 1.0
      %v912 = vrcp.pop %v910
      %v913 = vmul.f32 1.0, %v912
      %v914 = vrcp.pop %v911
      %v915 = vmul.f32 1.0, %v914
      %v916 = vtanh.pop %v886
      %v917 = vtanh.pop %v890
      %v918 = vxor.u32 %v887, 2147483648
      %v919 = vxor.u32 %v891, 2147483648
      %v920 = vmul.f32 %v918, 1.442695
      %v921 = vpow.pop %v920
      %v922 = vmul.f32 %v919, 1.442695
      %v923 = vpow.pop %v922
      %v924 = vadd.f32 %v921, 1.0
      %v925 = vadd.f32 %v923, 1.0
      %v926 = vrcp.pop %v924
      %v927 = vmul.f32 1.0, %v926
      %v928 = vrcp.pop %v925
      %v929 = vmul.f32 1.0, %v928
      %v931 = vrot.slane %v774, 6
      %v932 = vrot.slane %v774, 7
      %v935 = vmul.f32 %v913, %v931
      %v936 = vmul.f32 %v915, %v932
      %v937 = vmul.f32 %v901, %v916
      %v938 = vmul.f32 %v903, %v917
      %v939 = vadd.f32 %v935, %v937
      %v940 = vadd.f32 %v936, %v938
      %v941 = vtanh.pop %v939
      %v942 = vtanh.pop %v940
      %v943 = vmul.f32 %v927, %v941
      %v944 = vmul.f32 %v929, %v942
      %s945 = sadd.s32 %s260, 2
      %v946 = vstv %s945
      %vm947 = vcmp.lt.s32.totalorder %v946, %v259
      %v948 = vsel %vm947, 1, 0
      %949 = vset.pattern.permute.xlu0 0
      %950 = vperm.xlu0 %949, %v948
      %v951 = vpop.permute.xlu0 %950
      %vm952 = vcmp.eq.s32.totalorder %v951, 1
      %v955 = vrot.slane %v939, 2
      %v956 = vrot.slane %v940, 1
      %v957 = vsel %vm592, %v956, %v955
      %v959 = vsel %vm952, %v957, %v774
      %v962 = vrot.slane %v943, 2
      %v963 = vrot.slane %v944, 1
      %v964 = vsel %vm592, %v963, %v962
      %v966 = vsel %vm952, %v964, %v780
      %v967 = vpack.c.bf16 %v966, %v966
      %968 = vmatprep.subr.bf16.mxu0 %v389
      %969 = vmatpush1.bf16.msra.mxu0 %v388
      %970 = vmatprep.subr.bf16.mxu0 %v385
      %971 = vmatpush1.bf16.msra.mxu0 %v384
      %972 = vmatprep.subr.bf16.mxu0 %v381
      %973 = vmatpush1.bf16.msra.mxu0 %v380
      %974 = vmatprep.subr.bf16.mxu0 %v377
      %975 = vmatpush1.bf16.msra.mxu0 %v376
      %976 = vmatprep.subr.bf16.mxu0 %v373
      %977 = vmatpush1.bf16.msra.mxu0 %v372
      %978 = vmatprep.subr.bf16.mxu0 %v369
      %979 = vmatpush1.bf16.msra.mxu0 %v368
      %980 = vmatprep.subr.bf16.mxu0 %v365
      %981 = vmatpush1.bf16.msra.mxu0 %v364
      %982 = vmatprep.subr.bf16.mxu0 %v361
      %983 = vmatpush1.bf16.msra.mxu0 %v360
      %984 = vmatprep.subr.bf16.mxu0 0
      %985 = vmatpush2.bf16.msra.mxu0 0
      %986 = vmatprep.subr.bf16.mxu0 0
      %987 = vmatpush2.bf16.msra.mxu0 0
      %988 = vmatprep.subr.bf16.mxu0 0
      %989 = vmatpush2.bf16.msra.mxu0 0
      %990 = vmatprep.subr.bf16.mxu0 0
      %991 = vmatpush2.bf16.msra.mxu0 0
      %992 = vmatprep.subr.bf16.mxu0 0
      %993 = vmatpush2.bf16.msra.mxu0 0
      %994 = vmatprep.subr.bf16.mxu0 0
      %995 = vmatpush2.bf16.msra.mxu0 0
      %996 = vmatprep.subr.bf16.mxu0 0
      %997 = vmatpush2.bf16.msra.mxu0 0
      %998 = vmatprep.subr.bf16.mxu0 0
      %999 = vmatpush2.bf16.msra.mxu0 0
      %1000 = vmatprep.mubr.bf16.mxu0 0
      %1001 = vmatmul.mubr.bf16.gmra.mxu0 %v967
      %v1002 = vpop.f32.mrf.mxu0
      %v1003 = vadd.f32 0.0, %v1002
      %v1004 = vpop.f32.mrf.mxu0
      %v1005 = vadd.f32 0.0, %v1004
      %v1006 = vpop.f32.mrf.mxu0
      %v1007 = vpop.f32.mrf.mxu0
      %1008 = vdwg.mxu0
      %1009 = vmatprep.subr.bf16.mxu0 %v391
      %1010 = vmatpush1.bf16.msra.mxu0 %v390
      %1011 = vmatprep.subr.bf16.mxu0 %v387
      %1012 = vmatpush1.bf16.msra.mxu0 %v386
      %1013 = vmatprep.subr.bf16.mxu0 %v383
      %1014 = vmatpush1.bf16.msra.mxu0 %v382
      %1015 = vmatprep.subr.bf16.mxu0 %v379
      %1016 = vmatpush1.bf16.msra.mxu0 %v378
      %1017 = vmatprep.subr.bf16.mxu0 %v375
      %1018 = vmatpush1.bf16.msra.mxu0 %v374
      %1019 = vmatprep.subr.bf16.mxu0 %v371
      %1020 = vmatpush1.bf16.msra.mxu0 %v370
      %1021 = vmatprep.subr.bf16.mxu0 %v367
      %1022 = vmatpush1.bf16.msra.mxu0 %v366
      %1023 = vmatprep.subr.bf16.mxu0 %v363
      %1024 = vmatpush1.bf16.msra.mxu0 %v362
      %1025 = vmatprep.subr.bf16.mxu0 0
      %1026 = vmatpush2.bf16.msra.mxu0 0
      %1027 = vmatprep.subr.bf16.mxu0 0
      %1028 = vmatpush2.bf16.msra.mxu0 0
      %1029 = vmatprep.subr.bf16.mxu0 0
      %1030 = vmatpush2.bf16.msra.mxu0 0
      %1031 = vmatprep.subr.bf16.mxu0 0
      %1032 = vmatpush2.bf16.msra.mxu0 0
      %1033 = vmatprep.subr.bf16.mxu0 0
      %1034 = vmatpush2.bf16.msra.mxu0 0
      %1035 = vmatprep.subr.bf16.mxu0 0
      %1036 = vmatpush2.bf16.msra.mxu0 0
      %1037 = vmatprep.subr.bf16.mxu0 0
      %1038 = vmatpush2.bf16.msra.mxu0 0
      %1039 = vmatprep.subr.bf16.mxu0 0
      %1040 = vmatpush2.bf16.msra.mxu0 0
      %1041 = vmatprep.mubr.bf16.mxu0 0
      %1042 = vmatmul.mubr.bf16.gmra.mxu0 %v967
      %v1043 = vpop.f32.mrf.mxu0
      %v1044 = vadd.f32 0.0, %v1043
      %v1045 = vpop.f32.mrf.mxu0
      %v1046 = vadd.f32 0.0, %v1045
      %v1047 = vpop.f32.mrf.mxu0
      %v1048 = vpop.f32.mrf.mxu0
      %1049 = vdwg.mxu0
      %v1054 = vrot.slane %v1003, 5
      %v1055 = vrot.slane %v1005, 5
      %v1056 = vrot.slane %v1044, 5
      %v1057 = vrot.slane %v1046, 5
      %v1058 = vrot.slane %v1003, 6
      %v1059 = vrot.slane %v1005, 6
      %v1060 = vrot.slane %v1044, 6
      %v1061 = vrot.slane %v1046, 6
      %v1070 = vadd.f32 %v176, %v1054
      %v1071 = vadd.f32 %v178, %v1055
      %v1072 = vadd.f32 %v219, %v1056
      %v1073 = vadd.f32 %v221, %v1057
      %v1074 = vadd.f32 %v180, %v1058
      %v1075 = vadd.f32 %v182, %v1059
      %v1076 = vadd.f32 %v223, %v1060
      %v1077 = vadd.f32 %v225, %v1061
      %v1078 = vxor.u32 %v1070, 2147483648
      %v1079 = vxor.u32 %v1074, 2147483648
      %v1080 = vmul.f32 %v1078, 1.442695
      %v1081 = vpow.pop %v1080
      %v1082 = vmul.f32 %v1079, 1.442695
      %v1083 = vpow.pop %v1082
      %v1084 = vadd.f32 %v1081, 1.0
      %v1085 = vadd.f32 %v1083, 1.0
      %v1086 = vrcp.pop %v1084
      %v1087 = vmul.f32 1.0, %v1086
      %v1088 = vrcp.pop %v1085
      %v1089 = vmul.f32 1.0, %v1088
      %v1090 = vxor.u32 %v1071, 2147483648
      %v1091 = vxor.u32 %v1075, 2147483648
      %v1092 = vmul.f32 %v1090, 1.442695
      %v1093 = vpow.pop %v1092
      %v1094 = vmul.f32 %v1091, 1.442695
      %v1095 = vpow.pop %v1094
      %v1096 = vadd.f32 %v1093, 1.0
      %v1097 = vadd.f32 %v1095, 1.0
      %v1098 = vrcp.pop %v1096
      %v1099 = vmul.f32 1.0, %v1098
      %v1100 = vrcp.pop %v1097
      %v1101 = vmul.f32 1.0, %v1100
      %v1102 = vtanh.pop %v1072
      %v1103 = vtanh.pop %v1076
      %v1104 = vxor.u32 %v1073, 2147483648
      %v1105 = vxor.u32 %v1077, 2147483648
      %v1106 = vmul.f32 %v1104, 1.442695
      %v1107 = vpow.pop %v1106
      %v1108 = vmul.f32 %v1105, 1.442695
      %v1109 = vpow.pop %v1108
      %v1110 = vadd.f32 %v1107, 1.0
      %v1111 = vadd.f32 %v1109, 1.0
      %v1112 = vrcp.pop %v1110
      %v1113 = vmul.f32 1.0, %v1112
      %v1114 = vrcp.pop %v1111
      %v1115 = vmul.f32 1.0, %v1114
      %v1117 = vrot.slane %v959, 5
      %v1118 = vrot.slane %v959, 6
      %v1121 = vmul.f32 %v1099, %v1117
      %v1122 = vmul.f32 %v1101, %v1118
      %v1123 = vmul.f32 %v1087, %v1102
      %v1124 = vmul.f32 %v1089, %v1103
      %v1125 = vadd.f32 %v1121, %v1123
      %v1126 = vadd.f32 %v1122, %v1124
      %v1127 = vtanh.pop %v1125
      %v1128 = vtanh.pop %v1126
      %v1129 = vmul.f32 %v1113, %v1127
      %v1130 = vmul.f32 %v1115, %v1128
      %s1131 = sadd.s32 %s260, 3
      %v1132 = vstv %s1131
      %vm1133 = vcmp.lt.s32.totalorder %v1132, %v259
      %v1134 = vsel %vm1133, 1, 0
      %1135 = vset.pattern.permute.xlu0 0
      %1136 = vperm.xlu0 %1135, %v1134
      %v1137 = vpop.permute.xlu0 %1136
      %vm1138 = vcmp.eq.s32.totalorder %v1137, 1
      %v1141 = vrot.slane %v1125, 3
      %v1142 = vrot.slane %v1126, 2
      %v1143 = vsel %vm592, %v1142, %v1141
      %v1145 = vsel %vm1138, %v1143, %v959
      %v1148 = vrot.slane %v1129, 3
      %v1149 = vrot.slane %v1130, 2
      %v1150 = vsel %vm592, %v1149, %v1148
      %v1152 = vsel %vm1138, %v1150, %v966
      %v1153 = vpack.c.bf16 %v1152, %v1152
      %1154 = vmatprep.subr.bf16.mxu0 %v389
      %1155 = vmatpush1.bf16.msra.mxu0 %v388
      %1156 = vmatprep.subr.bf16.mxu0 %v385
      %1157 = vmatpush1.bf16.msra.mxu0 %v384
      %1158 = vmatprep.subr.bf16.mxu0 %v381
      %1159 = vmatpush1.bf16.msra.mxu0 %v380
      %1160 = vmatprep.subr.bf16.mxu0 %v377
      %1161 = vmatpush1.bf16.msra.mxu0 %v376
      %1162 = vmatprep.subr.bf16.mxu0 %v373
      %1163 = vmatpush1.bf16.msra.mxu0 %v372
      %1164 = vmatprep.subr.bf16.mxu0 %v369
      %1165 = vmatpush1.bf16.msra.mxu0 %v368
      %1166 = vmatprep.subr.bf16.mxu0 %v365
      %1167 = vmatpush1.bf16.msra.mxu0 %v364
      %1168 = vmatprep.subr.bf16.mxu0 %v361
      %1169 = vmatpush1.bf16.msra.mxu0 %v360
      %1170 = vmatprep.subr.bf16.mxu0 0
      %1171 = vmatpush2.bf16.msra.mxu0 0
      %1172 = vmatprep.subr.bf16.mxu0 0
      %1173 = vmatpush2.bf16.msra.mxu0 0
      %1174 = vmatprep.subr.bf16.mxu0 0
      %1175 = vmatpush2.bf16.msra.mxu0 0
      %1176 = vmatprep.subr.bf16.mxu0 0
      %1177 = vmatpush2.bf16.msra.mxu0 0
      %1178 = vmatprep.subr.bf16.mxu0 0
      %1179 = vmatpush2.bf16.msra.mxu0 0
      %1180 = vmatprep.subr.bf16.mxu0 0
      %1181 = vmatpush2.bf16.msra.mxu0 0
      %1182 = vmatprep.subr.bf16.mxu0 0
      %1183 = vmatpush2.bf16.msra.mxu0 0
      %1184 = vmatprep.subr.bf16.mxu0 0
      %1185 = vmatpush2.bf16.msra.mxu0 0
      %1186 = vmatprep.mubr.bf16.mxu0 0
      %1187 = vmatmul.mubr.bf16.gmra.mxu0 %v1153
      %v1188 = vpop.f32.mrf.mxu0
      %v1189 = vadd.f32 0.0, %v1188
      %v1190 = vpop.f32.mrf.mxu0
      %v1191 = vadd.f32 0.0, %v1190
      %v1192 = vpop.f32.mrf.mxu0
      %v1193 = vpop.f32.mrf.mxu0
      %1194 = vdwg.mxu0
      %1195 = vmatprep.subr.bf16.mxu0 %v391
      %1196 = vmatpush1.bf16.msra.mxu0 %v390
      %1197 = vmatprep.subr.bf16.mxu0 %v387
      %1198 = vmatpush1.bf16.msra.mxu0 %v386
      %1199 = vmatprep.subr.bf16.mxu0 %v383
      %1200 = vmatpush1.bf16.msra.mxu0 %v382
      %1201 = vmatprep.subr.bf16.mxu0 %v379
      %1202 = vmatpush1.bf16.msra.mxu0 %v378
      %1203 = vmatprep.subr.bf16.mxu0 %v375
      %1204 = vmatpush1.bf16.msra.mxu0 %v374
      %1205 = vmatprep.subr.bf16.mxu0 %v371
      %1206 = vmatpush1.bf16.msra.mxu0 %v370
      %1207 = vmatprep.subr.bf16.mxu0 %v367
      %1208 = vmatpush1.bf16.msra.mxu0 %v366
      %1209 = vmatprep.subr.bf16.mxu0 %v363
      %1210 = vmatpush1.bf16.msra.mxu0 %v362
      %1211 = vmatprep.subr.bf16.mxu0 0
      %1212 = vmatpush2.bf16.msra.mxu0 0
      %1213 = vmatprep.subr.bf16.mxu0 0
      %1214 = vmatpush2.bf16.msra.mxu0 0
      %1215 = vmatprep.subr.bf16.mxu0 0
      %1216 = vmatpush2.bf16.msra.mxu0 0
      %1217 = vmatprep.subr.bf16.mxu0 0
      %1218 = vmatpush2.bf16.msra.mxu0 0
      %1219 = vmatprep.subr.bf16.mxu0 0
      %1220 = vmatpush2.bf16.msra.mxu0 0
      %1221 = vmatprep.subr.bf16.mxu0 0
      %1222 = vmatpush2.bf16.msra.mxu0 0
      %1223 = vmatprep.subr.bf16.mxu0 0
      %1224 = vmatpush2.bf16.msra.mxu0 0
      %1225 = vmatprep.subr.bf16.mxu0 0
      %1226 = vmatpush2.bf16.msra.mxu0 0
      %1227 = vmatprep.mubr.bf16.mxu0 0
      %1228 = vmatmul.mubr.bf16.gmra.mxu0 %v1153
      %v1229 = vpop.f32.mrf.mxu0
      %v1230 = vadd.f32 0.0, %v1229
      %v1231 = vpop.f32.mrf.mxu0
      %v1232 = vadd.f32 0.0, %v1231
      %v1233 = vpop.f32.mrf.mxu0
      %v1234 = vpop.f32.mrf.mxu0
      %1235 = vdwg.mxu0
      %v1240 = vrot.slane %v1189, 4
      %v1241 = vrot.slane %v1191, 4
      %v1242 = vrot.slane %v1230, 4
      %v1243 = vrot.slane %v1232, 4
      %v1244 = vrot.slane %v1189, 5
      %v1245 = vrot.slane %v1191, 5
      %v1246 = vrot.slane %v1230, 5
      %v1247 = vrot.slane %v1232, 5
      %v1256 = vadd.f32 %v176, %v1240
      %v1257 = vadd.f32 %v178, %v1241
      %v1258 = vadd.f32 %v219, %v1242
      %v1259 = vadd.f32 %v221, %v1243
      %v1260 = vadd.f32 %v180, %v1244
      %v1261 = vadd.f32 %v182, %v1245
      %v1262 = vadd.f32 %v223, %v1246
      %v1263 = vadd.f32 %v225, %v1247
      %v1264 = vxor.u32 %v1256, 2147483648
      %v1265 = vxor.u32 %v1260, 2147483648
      %v1266 = vmul.f32 %v1264, 1.442695
      %v1267 = vpow.pop %v1266
      %v1268 = vmul.f32 %v1265, 1.442695
      %v1269 = vpow.pop %v1268
      %v1270 = vadd.f32 %v1267, 1.0
      %v1271 = vadd.f32 %v1269, 1.0
      %v1272 = vrcp.pop %v1270
      %v1273 = vmul.f32 1.0, %v1272
      %v1274 = vrcp.pop %v1271
      %v1275 = vmul.f32 1.0, %v1274
      %v1276 = vxor.u32 %v1257, 2147483648
      %v1277 = vxor.u32 %v1261, 2147483648
      %v1278 = vmul.f32 %v1276, 1.442695
      %v1279 = vpow.pop %v1278
      %v1280 = vmul.f32 %v1277, 1.442695
      %v1281 = vpow.pop %v1280
      %v1282 = vadd.f32 %v1279, 1.0
      %v1283 = vadd.f32 %v1281, 1.0
      %v1284 = vrcp.pop %v1282
      %v1285 = vmul.f32 1.0, %v1284
      %v1286 = vrcp.pop %v1283
      %v1287 = vmul.f32 1.0, %v1286
      %v1288 = vtanh.pop %v1258
      %v1289 = vtanh.pop %v1262
      %v1290 = vxor.u32 %v1259, 2147483648
      %v1291 = vxor.u32 %v1263, 2147483648
      %v1292 = vmul.f32 %v1290, 1.442695
      %v1293 = vpow.pop %v1292
      %v1294 = vmul.f32 %v1291, 1.442695
      %v1295 = vpow.pop %v1294
      %v1296 = vadd.f32 %v1293, 1.0
      %v1297 = vadd.f32 %v1295, 1.0
      %v1298 = vrcp.pop %v1296
      %v1299 = vmul.f32 1.0, %v1298
      %v1300 = vrcp.pop %v1297
      %v1301 = vmul.f32 1.0, %v1300
      %v1303 = vrot.slane %v1145, 4
      %v1304 = vrot.slane %v1145, 5
      %v1307 = vmul.f32 %v1285, %v1303
      %v1308 = vmul.f32 %v1287, %v1304
      %v1309 = vmul.f32 %v1273, %v1288
      %v1310 = vmul.f32 %v1275, %v1289
      %v1311 = vadd.f32 %v1307, %v1309
      %v1312 = vadd.f32 %v1308, %v1310
      %v1313 = vtanh.pop %v1311
      %v1314 = vtanh.pop %v1312
      %v1315 = vmul.f32 %v1299, %v1313
      %v1316 = vmul.f32 %v1301, %v1314
      %s1317 = sadd.s32 %s260, 4
      %v1318 = vstv %s1317
      %vm1319 = vcmp.lt.s32.totalorder %v1318, %v259
      %v1320 = vsel %vm1319, 1, 0
      %1321 = vset.pattern.permute.xlu0 0
      %1322 = vperm.xlu0 %1321, %v1320
      %v1323 = vpop.permute.xlu0 %1322
      %vm1324 = vcmp.eq.s32.totalorder %v1323, 1
      %v1327 = vrot.slane %v1311, 4
      %v1328 = vrot.slane %v1312, 3
      %v1329 = vsel %vm592, %v1328, %v1327
      %v1331 = vsel %vm1324, %v1329, %v1145
      %v1334 = vrot.slane %v1315, 4
      %v1335 = vrot.slane %v1316, 3
      %v1336 = vsel %vm592, %v1335, %v1334
      %v1338 = vsel %vm1324, %v1336, %v1152
      %v1339 = vpack.c.bf16 %v1338, %v1338
      %1340 = vmatprep.subr.bf16.mxu0 %v389
      %1341 = vmatpush1.bf16.msra.mxu0 %v388
      %1342 = vmatprep.subr.bf16.mxu0 %v385
      %1343 = vmatpush1.bf16.msra.mxu0 %v384
      %1344 = vmatprep.subr.bf16.mxu0 %v381
      %1345 = vmatpush1.bf16.msra.mxu0 %v380
      %1346 = vmatprep.subr.bf16.mxu0 %v377
      %1347 = vmatpush1.bf16.msra.mxu0 %v376
      %1348 = vmatprep.subr.bf16.mxu0 %v373
      %1349 = vmatpush1.bf16.msra.mxu0 %v372
      %1350 = vmatprep.subr.bf16.mxu0 %v369
      %1351 = vmatpush1.bf16.msra.mxu0 %v368
      %1352 = vmatprep.subr.bf16.mxu0 %v365
      %1353 = vmatpush1.bf16.msra.mxu0 %v364
      %1354 = vmatprep.subr.bf16.mxu0 %v361
      %1355 = vmatpush1.bf16.msra.mxu0 %v360
      %1356 = vmatprep.subr.bf16.mxu0 0
      %1357 = vmatpush2.bf16.msra.mxu0 0
      %1358 = vmatprep.subr.bf16.mxu0 0
      %1359 = vmatpush2.bf16.msra.mxu0 0
      %1360 = vmatprep.subr.bf16.mxu0 0
      %1361 = vmatpush2.bf16.msra.mxu0 0
      %1362 = vmatprep.subr.bf16.mxu0 0
      %1363 = vmatpush2.bf16.msra.mxu0 0
      %1364 = vmatprep.subr.bf16.mxu0 0
      %1365 = vmatpush2.bf16.msra.mxu0 0
      %1366 = vmatprep.subr.bf16.mxu0 0
      %1367 = vmatpush2.bf16.msra.mxu0 0
      %1368 = vmatprep.subr.bf16.mxu0 0
      %1369 = vmatpush2.bf16.msra.mxu0 0
      %1370 = vmatprep.subr.bf16.mxu0 0
      %1371 = vmatpush2.bf16.msra.mxu0 0
      %1372 = vmatprep.mubr.bf16.mxu0 0
      %1373 = vmatmul.mubr.bf16.gmra.mxu0 %v1339
      %v1374 = vpop.f32.mrf.mxu0
      %v1375 = vadd.f32 0.0, %v1374
      %v1376 = vpop.f32.mrf.mxu0
      %v1377 = vadd.f32 0.0, %v1376
      %v1378 = vpop.f32.mrf.mxu0
      %v1379 = vpop.f32.mrf.mxu0
      %1380 = vdwg.mxu0
      %1381 = vmatprep.subr.bf16.mxu0 %v391
      %1382 = vmatpush1.bf16.msra.mxu0 %v390
      %1383 = vmatprep.subr.bf16.mxu0 %v387
      %1384 = vmatpush1.bf16.msra.mxu0 %v386
      %1385 = vmatprep.subr.bf16.mxu0 %v383
      %1386 = vmatpush1.bf16.msra.mxu0 %v382
      %1387 = vmatprep.subr.bf16.mxu0 %v379
      %1388 = vmatpush1.bf16.msra.mxu0 %v378
      %1389 = vmatprep.subr.bf16.mxu0 %v375
      %1390 = vmatpush1.bf16.msra.mxu0 %v374
      %1391 = vmatprep.subr.bf16.mxu0 %v371
      %1392 = vmatpush1.bf16.msra.mxu0 %v370
      %1393 = vmatprep.subr.bf16.mxu0 %v367
      %1394 = vmatpush1.bf16.msra.mxu0 %v366
      %1395 = vmatprep.subr.bf16.mxu0 %v363
      %1396 = vmatpush1.bf16.msra.mxu0 %v362
      %1397 = vmatprep.subr.bf16.mxu0 0
      %1398 = vmatpush2.bf16.msra.mxu0 0
      %1399 = vmatprep.subr.bf16.mxu0 0
      %1400 = vmatpush2.bf16.msra.mxu0 0
      %1401 = vmatprep.subr.bf16.mxu0 0
      %1402 = vmatpush2.bf16.msra.mxu0 0
      %1403 = vmatprep.subr.bf16.mxu0 0
      %1404 = vmatpush2.bf16.msra.mxu0 0
      %1405 = vmatprep.subr.bf16.mxu0 0
      %1406 = vmatpush2.bf16.msra.mxu0 0
      %1407 = vmatprep.subr.bf16.mxu0 0
      %1408 = vmatpush2.bf16.msra.mxu0 0
      %1409 = vmatprep.subr.bf16.mxu0 0
      %1410 = vmatpush2.bf16.msra.mxu0 0
      %1411 = vmatprep.subr.bf16.mxu0 0
      %1412 = vmatpush2.bf16.msra.mxu0 0
      %1413 = vmatprep.mubr.bf16.mxu0 0
      %1414 = vmatmul.mubr.bf16.gmra.mxu0 %v1339
      %v1415 = vpop.f32.mrf.mxu0
      %v1416 = vadd.f32 0.0, %v1415
      %v1417 = vpop.f32.mrf.mxu0
      %v1418 = vadd.f32 0.0, %v1417
      %v1419 = vpop.f32.mrf.mxu0
      %v1420 = vpop.f32.mrf.mxu0
      %1421 = vdwg.mxu0
      %v1426 = vrot.slane %v1375, 3
      %v1427 = vrot.slane %v1377, 3
      %v1428 = vrot.slane %v1416, 3
      %v1429 = vrot.slane %v1418, 3
      %v1430 = vrot.slane %v1375, 4
      %v1431 = vrot.slane %v1377, 4
      %v1432 = vrot.slane %v1416, 4
      %v1433 = vrot.slane %v1418, 4
      %v1442 = vadd.f32 %v176, %v1426
      %v1443 = vadd.f32 %v178, %v1427
      %v1444 = vadd.f32 %v219, %v1428
      %v1445 = vadd.f32 %v221, %v1429
      %v1446 = vadd.f32 %v180, %v1430
      %v1447 = vadd.f32 %v182, %v1431
      %v1448 = vadd.f32 %v223, %v1432
      %v1449 = vadd.f32 %v225, %v1433
      %v1450 = vxor.u32 %v1442, 2147483648
      %v1451 = vxor.u32 %v1446, 2147483648
      %v1452 = vmul.f32 %v1450, 1.442695
      %v1453 = vpow.pop %v1452
      %v1454 = vmul.f32 %v1451, 1.442695
      %v1455 = vpow.pop %v1454
      %v1456 = vadd.f32 %v1453, 1.0
      %v1457 = vadd.f32 %v1455, 1.0
      %v1458 = vrcp.pop %v1456
      %v1459 = vmul.f32 1.0, %v1458
      %v1460 = vrcp.pop %v1457
      %v1461 = vmul.f32 1.0, %v1460
      %v1462 = vxor.u32 %v1443, 2147483648
      %v1463 = vxor.u32 %v1447, 2147483648
      %v1464 = vmul.f32 %v1462, 1.442695
      %v1465 = vpow.pop %v1464
      %v1466 = vmul.f32 %v1463, 1.442695
      %v1467 = vpow.pop %v1466
      %v1468 = vadd.f32 %v1465, 1.0
      %v1469 = vadd.f32 %v1467, 1.0
      %v1470 = vrcp.pop %v1468
      %v1471 = vmul.f32 1.0, %v1470
      %v1472 = vrcp.pop %v1469
      %v1473 = vmul.f32 1.0, %v1472
      %v1474 = vtanh.pop %v1444
      %v1475 = vtanh.pop %v1448
      %v1476 = vxor.u32 %v1445, 2147483648
      %v1477 = vxor.u32 %v1449, 2147483648
      %v1478 = vmul.f32 %v1476, 1.442695
      %v1479 = vpow.pop %v1478
      %v1480 = vmul.f32 %v1477, 1.442695
      %v1481 = vpow.pop %v1480
      %v1482 = vadd.f32 %v1479, 1.0
      %v1483 = vadd.f32 %v1481, 1.0
      %v1484 = vrcp.pop %v1482
      %v1485 = vmul.f32 1.0, %v1484
      %v1486 = vrcp.pop %v1483
      %v1487 = vmul.f32 1.0, %v1486
      %v1489 = vrot.slane %v1331, 3
      %v1490 = vrot.slane %v1331, 4
      %v1493 = vmul.f32 %v1471, %v1489
      %v1494 = vmul.f32 %v1473, %v1490
      %v1495 = vmul.f32 %v1459, %v1474
      %v1496 = vmul.f32 %v1461, %v1475
      %v1497 = vadd.f32 %v1493, %v1495
      %v1498 = vadd.f32 %v1494, %v1496
      %v1499 = vtanh.pop %v1497
      %v1500 = vtanh.pop %v1498
      %v1501 = vmul.f32 %v1485, %v1499
      %v1502 = vmul.f32 %v1487, %v1500
      %s1503 = sadd.s32 %s260, 5
      %v1504 = vstv %s1503
      %vm1505 = vcmp.lt.s32.totalorder %v1504, %v259
      %v1506 = vsel %vm1505, 1, 0
      %1507 = vset.pattern.permute.xlu0 0
      %1508 = vperm.xlu0 %1507, %v1506
      %v1509 = vpop.permute.xlu0 %1508
      %vm1510 = vcmp.eq.s32.totalorder %v1509, 1
      %v1513 = vrot.slane %v1497, 5
      %v1514 = vrot.slane %v1498, 4
      %v1515 = vsel %vm592, %v1514, %v1513
      %v1517 = vsel %vm1510, %v1515, %v1331
      %v1520 = vrot.slane %v1501, 5
      %v1521 = vrot.slane %v1502, 4
      %v1522 = vsel %vm592, %v1521, %v1520
      %v1524 = vsel %vm1510, %v1522, %v1338
      %v1525 = vpack.c.bf16 %v1524, %v1524
      %1526 = vmatprep.subr.bf16.mxu0 %v389
      %1527 = vmatpush1.bf16.msra.mxu0 %v388
      %1528 = vmatprep.subr.bf16.mxu0 %v385
      %1529 = vmatpush1.bf16.msra.mxu0 %v384
      %1530 = vmatprep.subr.bf16.mxu0 %v381
      %1531 = vmatpush1.bf16.msra.mxu0 %v380
      %1532 = vmatprep.subr.bf16.mxu0 %v377
      %1533 = vmatpush1.bf16.msra.mxu0 %v376
      %1534 = vmatprep.subr.bf16.mxu0 %v373
      %1535 = vmatpush1.bf16.msra.mxu0 %v372
      %1536 = vmatprep.subr.bf16.mxu0 %v369
      %1537 = vmatpush1.bf16.msra.mxu0 %v368
      %1538 = vmatprep.subr.bf16.mxu0 %v365
      %1539 = vmatpush1.bf16.msra.mxu0 %v364
      %1540 = vmatprep.subr.bf16.mxu0 %v361
      %1541 = vmatpush1.bf16.msra.mxu0 %v360
      %1542 = vmatprep.subr.bf16.mxu0 0
      %1543 = vmatpush2.bf16.msra.mxu0 0
      %1544 = vmatprep.subr.bf16.mxu0 0
      %1545 = vmatpush2.bf16.msra.mxu0 0
      %1546 = vmatprep.subr.bf16.mxu0 0
      %1547 = vmatpush2.bf16.msra.mxu0 0
      %1548 = vmatprep.subr.bf16.mxu0 0
      %1549 = vmatpush2.bf16.msra.mxu0 0
      %1550 = vmatprep.subr.bf16.mxu0 0
      %1551 = vmatpush2.bf16.msra.mxu0 0
      %1552 = vmatprep.subr.bf16.mxu0 0
      %1553 = vmatpush2.bf16.msra.mxu0 0
      %1554 = vmatprep.subr.bf16.mxu0 0
      %1555 = vmatpush2.bf16.msra.mxu0 0
      %1556 = vmatprep.subr.bf16.mxu0 0
      %1557 = vmatpush2.bf16.msra.mxu0 0
      %1558 = vmatprep.mubr.bf16.mxu0 0
      %1559 = vmatmul.mubr.bf16.gmra.mxu0 %v1525
      %v1560 = vpop.f32.mrf.mxu0
      %v1561 = vadd.f32 0.0, %v1560
      %v1562 = vpop.f32.mrf.mxu0
      %v1563 = vadd.f32 0.0, %v1562
      %v1564 = vpop.f32.mrf.mxu0
      %v1565 = vpop.f32.mrf.mxu0
      %1566 = vdwg.mxu0
      %1567 = vmatprep.subr.bf16.mxu0 %v391
      %1568 = vmatpush1.bf16.msra.mxu0 %v390
      %1569 = vmatprep.subr.bf16.mxu0 %v387
      %1570 = vmatpush1.bf16.msra.mxu0 %v386
      %1571 = vmatprep.subr.bf16.mxu0 %v383
      %1572 = vmatpush1.bf16.msra.mxu0 %v382
      %1573 = vmatprep.subr.bf16.mxu0 %v379
      %1574 = vmatpush1.bf16.msra.mxu0 %v378
      %1575 = vmatprep.subr.bf16.mxu0 %v375
      %1576 = vmatpush1.bf16.msra.mxu0 %v374
      %1577 = vmatprep.subr.bf16.mxu0 %v371
      %1578 = vmatpush1.bf16.msra.mxu0 %v370
      %1579 = vmatprep.subr.bf16.mxu0 %v367
      %1580 = vmatpush1.bf16.msra.mxu0 %v366
      %1581 = vmatprep.subr.bf16.mxu0 %v363
      %1582 = vmatpush1.bf16.msra.mxu0 %v362
      %1583 = vmatprep.subr.bf16.mxu0 0
      %1584 = vmatpush2.bf16.msra.mxu0 0
      %1585 = vmatprep.subr.bf16.mxu0 0
      %1586 = vmatpush2.bf16.msra.mxu0 0
      %1587 = vmatprep.subr.bf16.mxu0 0
      %1588 = vmatpush2.bf16.msra.mxu0 0
      %1589 = vmatprep.subr.bf16.mxu0 0
      %1590 = vmatpush2.bf16.msra.mxu0 0
      %1591 = vmatprep.subr.bf16.mxu0 0
      %1592 = vmatpush2.bf16.msra.mxu0 0
      %1593 = vmatprep.subr.bf16.mxu0 0
      %1594 = vmatpush2.bf16.msra.mxu0 0
      %1595 = vmatprep.subr.bf16.mxu0 0
      %1596 = vmatpush2.bf16.msra.mxu0 0
      %1597 = vmatprep.subr.bf16.mxu0 0
      %1598 = vmatpush2.bf16.msra.mxu0 0
      %1599 = vmatprep.mubr.bf16.mxu0 0
      %1600 = vmatmul.mubr.bf16.gmra.mxu0 %v1525
      %v1601 = vpop.f32.mrf.mxu0
      %v1602 = vadd.f32 0.0, %v1601
      %v1603 = vpop.f32.mrf.mxu0
      %v1604 = vadd.f32 0.0, %v1603
      %v1605 = vpop.f32.mrf.mxu0
      %v1606 = vpop.f32.mrf.mxu0
      %1607 = vdwg.mxu0
      %v1612 = vrot.slane %v1561, 2
      %v1613 = vrot.slane %v1563, 2
      %v1614 = vrot.slane %v1602, 2
      %v1615 = vrot.slane %v1604, 2
      %v1616 = vrot.slane %v1561, 3
      %v1617 = vrot.slane %v1563, 3
      %v1618 = vrot.slane %v1602, 3
      %v1619 = vrot.slane %v1604, 3
      %v1628 = vadd.f32 %v176, %v1612
      %v1629 = vadd.f32 %v178, %v1613
      %v1630 = vadd.f32 %v219, %v1614
      %v1631 = vadd.f32 %v221, %v1615
      %v1632 = vadd.f32 %v180, %v1616
      %v1633 = vadd.f32 %v182, %v1617
      %v1634 = vadd.f32 %v223, %v1618
      %v1635 = vadd.f32 %v225, %v1619
      %v1636 = vxor.u32 %v1628, 2147483648
      %v1637 = vxor.u32 %v1632, 2147483648
      %v1638 = vmul.f32 %v1636, 1.442695
      %v1639 = vpow.pop %v1638
      %v1640 = vmul.f32 %v1637, 1.442695
      %v1641 = vpow.pop %v1640
      %v1642 = vadd.f32 %v1639, 1.0
      %v1643 = vadd.f32 %v1641, 1.0
      %v1644 = vrcp.pop %v1642
      %v1645 = vmul.f32 1.0, %v1644
      %v1646 = vrcp.pop %v1643
      %v1647 = vmul.f32 1.0, %v1646
      %v1648 = vxor.u32 %v1629, 2147483648
      %v1649 = vxor.u32 %v1633, 2147483648
      %v1650 = vmul.f32 %v1648, 1.442695
      %v1651 = vpow.pop %v1650
      %v1652 = vmul.f32 %v1649, 1.442695
      %v1653 = vpow.pop %v1652
      %v1654 = vadd.f32 %v1651, 1.0
      %v1655 = vadd.f32 %v1653, 1.0
      %v1656 = vrcp.pop %v1654
      %v1657 = vmul.f32 1.0, %v1656
      %v1658 = vrcp.pop %v1655
      %v1659 = vmul.f32 1.0, %v1658
      %v1660 = vtanh.pop %v1630
      %v1661 = vtanh.pop %v1634
      %v1662 = vxor.u32 %v1631, 2147483648
      %v1663 = vxor.u32 %v1635, 2147483648
      %v1664 = vmul.f32 %v1662, 1.442695
      %v1665 = vpow.pop %v1664
      %v1666 = vmul.f32 %v1663, 1.442695
      %v1667 = vpow.pop %v1666
      %v1668 = vadd.f32 %v1665, 1.0
      %v1669 = vadd.f32 %v1667, 1.0
      %v1670 = vrcp.pop %v1668
      %v1671 = vmul.f32 1.0, %v1670
      %v1672 = vrcp.pop %v1669
      %v1673 = vmul.f32 1.0, %v1672
      %v1675 = vrot.slane %v1517, 2
      %v1676 = vrot.slane %v1517, 3
      %v1679 = vmul.f32 %v1657, %v1675
      %v1680 = vmul.f32 %v1659, %v1676
      %v1681 = vmul.f32 %v1645, %v1660
      %v1682 = vmul.f32 %v1647, %v1661
      %v1683 = vadd.f32 %v1679, %v1681
      %v1684 = vadd.f32 %v1680, %v1682
      %v1685 = vtanh.pop %v1683
      %v1686 = vtanh.pop %v1684
      %v1687 = vmul.f32 %v1671, %v1685
      %v1688 = vmul.f32 %v1673, %v1686
      %s1689 = sadd.s32 %s260, 6
      %v1690 = vstv %s1689
      %vm1691 = vcmp.lt.s32.totalorder %v1690, %v259
      %v1692 = vsel %vm1691, 1, 0
      %1693 = vset.pattern.permute.xlu0 0
      %1694 = vperm.xlu0 %1693, %v1692
      %v1695 = vpop.permute.xlu0 %1694
      %vm1696 = vcmp.eq.s32.totalorder %v1695, 1
      %v1699 = vrot.slane %v1683, 6
      %v1700 = vrot.slane %v1684, 5
      %v1701 = vsel %vm592, %v1700, %v1699
      %v1703 = vsel %vm1696, %v1701, %v1517
      %v1706 = vrot.slane %v1687, 6
      %v1707 = vrot.slane %v1688, 5
      %v1708 = vsel %vm592, %v1707, %v1706
      %v1710 = vsel %vm1696, %v1708, %v1524
      %v1711 = vpack.c.bf16 %v1710, %v1710
      %1712 = vmatprep.subr.bf16.mxu0 %v389
      %1713 = vmatpush1.bf16.msra.mxu0 %v388
      %1714 = vmatprep.subr.bf16.mxu0 %v385
      %1715 = vmatpush1.bf16.msra.mxu0 %v384
      %1716 = vmatprep.subr.bf16.mxu0 %v381
      %1717 = vmatpush1.bf16.msra.mxu0 %v380
      %1718 = vmatprep.subr.bf16.mxu0 %v377
      %1719 = vmatpush1.bf16.msra.mxu0 %v376
      %1720 = vmatprep.subr.bf16.mxu0 %v373
      %1721 = vmatpush1.bf16.msra.mxu0 %v372
      %1722 = vmatprep.subr.bf16.mxu0 %v369
      %1723 = vmatpush1.bf16.msra.mxu0 %v368
      %1724 = vmatprep.subr.bf16.mxu0 %v365
      %1725 = vmatpush1.bf16.msra.mxu0 %v364
      %1726 = vmatprep.subr.bf16.mxu0 %v361
      %1727 = vmatpush1.bf16.msra.mxu0 %v360
      %1728 = vmatprep.subr.bf16.mxu0 0
      %1729 = vmatpush2.bf16.msra.mxu0 0
      %1730 = vmatprep.subr.bf16.mxu0 0
      %1731 = vmatpush2.bf16.msra.mxu0 0
      %1732 = vmatprep.subr.bf16.mxu0 0
      %1733 = vmatpush2.bf16.msra.mxu0 0
      %1734 = vmatprep.subr.bf16.mxu0 0
      %1735 = vmatpush2.bf16.msra.mxu0 0
      %1736 = vmatprep.subr.bf16.mxu0 0
      %1737 = vmatpush2.bf16.msra.mxu0 0
      %1738 = vmatprep.subr.bf16.mxu0 0
      %1739 = vmatpush2.bf16.msra.mxu0 0
      %1740 = vmatprep.subr.bf16.mxu0 0
      %1741 = vmatpush2.bf16.msra.mxu0 0
      %1742 = vmatprep.subr.bf16.mxu0 0
      %1743 = vmatpush2.bf16.msra.mxu0 0
      %1744 = vmatprep.mubr.bf16.mxu0 0
      %1745 = vmatmul.mubr.bf16.gmra.mxu0 %v1711
      %v1746 = vpop.f32.mrf.mxu0
      %v1747 = vadd.f32 0.0, %v1746
      %v1748 = vpop.f32.mrf.mxu0
      %v1749 = vadd.f32 0.0, %v1748
      %v1750 = vpop.f32.mrf.mxu0
      %v1751 = vpop.f32.mrf.mxu0
      %1752 = vdwg.mxu0
      %1753 = vmatprep.subr.bf16.mxu0 %v391
      %1754 = vmatpush1.bf16.msra.mxu0 %v390
      %1755 = vmatprep.subr.bf16.mxu0 %v387
      %1756 = vmatpush1.bf16.msra.mxu0 %v386
      %1757 = vmatprep.subr.bf16.mxu0 %v383
      %1758 = vmatpush1.bf16.msra.mxu0 %v382
      %1759 = vmatprep.subr.bf16.mxu0 %v379
      %1760 = vmatpush1.bf16.msra.mxu0 %v378
      %1761 = vmatprep.subr.bf16.mxu0 %v375
      %1762 = vmatpush1.bf16.msra.mxu0 %v374
      %1763 = vmatprep.subr.bf16.mxu0 %v371
      %1764 = vmatpush1.bf16.msra.mxu0 %v370
      %1765 = vmatprep.subr.bf16.mxu0 %v367
      %1766 = vmatpush1.bf16.msra.mxu0 %v366
      %1767 = vmatprep.subr.bf16.mxu0 %v363
      %1768 = vmatpush1.bf16.msra.mxu0 %v362
      %1769 = vmatprep.subr.bf16.mxu0 0
      %1770 = vmatpush2.bf16.msra.mxu0 0
      %1771 = vmatprep.subr.bf16.mxu0 0
      %1772 = vmatpush2.bf16.msra.mxu0 0
      %1773 = vmatprep.subr.bf16.mxu0 0
      %1774 = vmatpush2.bf16.msra.mxu0 0
      %1775 = vmatprep.subr.bf16.mxu0 0
      %1776 = vmatpush2.bf16.msra.mxu0 0
      %1777 = vmatprep.subr.bf16.mxu0 0
      %1778 = vmatpush2.bf16.msra.mxu0 0
      %1779 = vmatprep.subr.bf16.mxu0 0
      %1780 = vmatpush2.bf16.msra.mxu0 0
      %1781 = vmatprep.subr.bf16.mxu0 0
      %1782 = vmatpush2.bf16.msra.mxu0 0
      %1783 = vmatprep.subr.bf16.mxu0 0
      %1784 = vmatpush2.bf16.msra.mxu0 0
      %1785 = vmatprep.mubr.bf16.mxu0 0
      %1786 = vmatmul.mubr.bf16.gmra.mxu0 %v1711
      %v1787 = vpop.f32.mrf.mxu0
      %v1788 = vadd.f32 0.0, %v1787
      %v1789 = vpop.f32.mrf.mxu0
      %v1790 = vadd.f32 0.0, %v1789
      %v1791 = vpop.f32.mrf.mxu0
      %v1792 = vpop.f32.mrf.mxu0
      %1793 = vdwg.mxu0
      %v1798 = vrot.slane %v1747, 1
      %v1799 = vrot.slane %v1749, 1
      %v1800 = vrot.slane %v1788, 1
      %v1801 = vrot.slane %v1790, 1
      %v1802 = vrot.slane %v1747, 2
      %v1803 = vrot.slane %v1749, 2
      %v1804 = vrot.slane %v1788, 2
      %v1805 = vrot.slane %v1790, 2
      %v1814 = vadd.f32 %v176, %v1798
      %v1815 = vadd.f32 %v178, %v1799
      %v1816 = vadd.f32 %v219, %v1800
      %v1817 = vadd.f32 %v221, %v1801
      %v1818 = vadd.f32 %v180, %v1802
      %v1819 = vadd.f32 %v182, %v1803
      %v1820 = vadd.f32 %v223, %v1804
      %v1821 = vadd.f32 %v225, %v1805
      %v1822 = vxor.u32 %v1814, 2147483648
      %v1823 = vxor.u32 %v1818, 2147483648
      %v1824 = vmul.f32 %v1822, 1.442695
      %v1825 = vpow.pop %v1824
      %v1826 = vmul.f32 %v1823, 1.442695
      %v1827 = vpow.pop %v1826
      %v1828 = vadd.f32 %v1825, 1.0
      %v1829 = vadd.f32 %v1827, 1.0
      %v1830 = vrcp.pop %v1828
      %v1831 = vmul.f32 1.0, %v1830
      %v1832 = vrcp.pop %v1829
      %v1833 = vmul.f32 1.0, %v1832
      %v1834 = vxor.u32 %v1815, 2147483648
      %v1835 = vxor.u32 %v1819, 2147483648
      %v1836 = vmul.f32 %v1834, 1.442695
      %v1837 = vpow.pop %v1836
      %v1838 = vmul.f32 %v1835, 1.442695
      %v1839 = vpow.pop %v1838
      %v1840 = vadd.f32 %v1837, 1.0
      %v1841 = vadd.f32 %v1839, 1.0
      %v1842 = vrcp.pop %v1840
      %v1843 = vmul.f32 1.0, %v1842
      %v1844 = vrcp.pop %v1841
      %v1845 = vmul.f32 1.0, %v1844
      %v1846 = vtanh.pop %v1816
      %v1847 = vtanh.pop %v1820
      %v1848 = vxor.u32 %v1817, 2147483648
      %v1849 = vxor.u32 %v1821, 2147483648
      %v1850 = vmul.f32 %v1848, 1.442695
      %v1851 = vpow.pop %v1850
      %v1852 = vmul.f32 %v1849, 1.442695
      %v1853 = vpow.pop %v1852
      %v1854 = vadd.f32 %v1851, 1.0
      %v1855 = vadd.f32 %v1853, 1.0
      %v1856 = vrcp.pop %v1854
      %v1857 = vmul.f32 1.0, %v1856
      %v1858 = vrcp.pop %v1855
      %v1859 = vmul.f32 1.0, %v1858
      %v1861 = vrot.slane %v1703, 1
      %v1862 = vrot.slane %v1703, 2
      %v1865 = vmul.f32 %v1843, %v1861
      %v1866 = vmul.f32 %v1845, %v1862
      %v1867 = vmul.f32 %v1831, %v1846
      %v1868 = vmul.f32 %v1833, %v1847
      %v1869 = vadd.f32 %v1865, %v1867
      %v1870 = vadd.f32 %v1866, %v1868
      %v1871 = vtanh.pop %v1869
      %v1872 = vtanh.pop %v1870
      %v1873 = vmul.f32 %v1857, %v1871
      %v1874 = vmul.f32 %v1859, %v1872
      %s1875 = sadd.s32 %s260, 7
      %v1876 = vstv %s1875
      %vm1877 = vcmp.lt.s32.totalorder %v1876, %v259
      %v1878 = vsel %vm1877, 1, 0
      %1879 = vset.pattern.permute.xlu0 0
      %1880 = vperm.xlu0 %1879, %v1878
      %v1881 = vpop.permute.xlu0 %1880
      %vm1882 = vcmp.eq.s32.totalorder %v1881, 1
      %v1885 = vrot.slane %v1869, 7
      %v1886 = vrot.slane %v1870, 6
      %v1887 = vsel %vm592, %v1886, %v1885
      %v1889 = vsel %vm1882, %v1887, %v1703
      %v1892 = vrot.slane %v1873, 7
      %v1893 = vrot.slane %v1874, 6
      %v1894 = vsel %vm592, %v1893, %v1892
      %v1896 = vsel %vm1882, %v1894, %v1710
      %1897 = vst [vmem:[#allocation2] sm:$0x3] %v1896
      %1898 = vst [vmem:[#allocation3] sm:$0x3] %v1889
    $region41: #{tpu_custom_call.1} parent=1 // pred_fallthru
      _
    // Predicated region
    $region42: #{tpu_custom_call.1} parent=1 // pred_check
      %p1899 = pneg %p75
    $region43: #{tpu_custom_call.1} parent=1 // pred_check_branch
      %1901 = sbr.rel (%p1899) target = $region45
    $region44: #{tpu_custom_call.1} parent=1 // pred_region
      %v1902 = vld [vmem:[#allocation2] sm:$0x3]
      %1903 = vst [vmem:[#allocation12] sm:$0x3] %v1902
    $region45: #{tpu_custom_call.1} parent=1 // pred_fallthru
      _
    // Predicated region
    $region46: #{tpu_custom_call.1} parent=1 // pred_check
      _
    $region47: #{tpu_custom_call.1} parent=1 // pred_check_branch
      %1905 = sbr.rel (0) target = $region49
    $region48: #{tpu_custom_call.1} parent=1 // pred_region
      %s1907 = ssub.s32 32, 32
      %1908 = vsyncadd [#allocation8], %s1907
      %s1910 = sshll.u32 [#allocation12], 4
      %s1911 = int_to_ptr.vmem [resolvable:$true] %s1910
      %1913 = dma.vmem_to_hbm [thread:$0]  %s1911, 32, %s6, [#allocation8]
    $region49: #{tpu_custom_call.1} parent=1 // pred_fallthru
      _
    // Predicated region
    $region50: #{tpu_custom_call.1} parent=1 // pred_check
      _
    $region51: #{tpu_custom_call.1} parent=1 // pred_check_branch
      %1915 = sbr.rel (0) target = $region53
    $region52: #{tpu_custom_call.1} parent=1 // pred_region
      %1916 = dma.done [#allocation8], 32
    $region53: #{tpu_custom_call.1} parent=1 // pred_fallthru
      _
    %1917 = vsyncpa [#allocation7], 1
    %1918 = vsyncpa [#allocation10], 1
    %1919 = vsyncpa [#allocation8], 1

</llo_original>
